<compile_context>
chip_gen: v7x
topology: tpu7x:2x2x1
jax: 0.10.0
libtpu: 0.0.40
codegen_flags: <defaults>
</compile_context>

<pallas_src>
import functools
import math

import jax
import jax.numpy as jnp
from jax.experimental import pallas as pl
from jax.experimental.pallas import tpu as pltpu

KSIZE = 7
PAD = KSIZE // 2  # 3


def _sa_kernel(w_ref, coords_ref, x_ref, o_ref, *, C, H, W):
    # w_ref      : SMEM f32[2*7*7]   flattened conv weight (scalar reads)
    # coords_ref : VMEM i32[2, HW]   row 0: h = p // W, row 1: w = p % W
    # x_ref      : VMEM [NB, C, HW]  batch chunk of the input (native dtype)
    # o_ref      : VMEM [NB, HW]     sigmoid(conv) output (lane-dense slab)
    HW = H * W
    LANE = 1  # minor axis of the (NB, HW) slabs (pltpu.roll needs axis >= 0)

    # ---- chunked channel reduction: no full f32 copy of the block ----------
    CH = 8
    n_full = C // CH
    rem = C - n_full * CH

    def chunk_stats(c0, cn):
        chunk = x_ref[:, pl.ds(c0, cn), :]                  # (NB, cn, HW) native
        csum = jnp.sum(chunk.astype(jnp.float32), axis=1)   # f32 running sum
        cmax = jnp.max(chunk, axis=1)                       # native-dtype max (exact)
        return csum, cmax

    sum_acc = None
    max_acc = None
    if n_full > 0:
        s0, m0 = chunk_stats(0, CH)

        def body(i, carry):
            s, m = carry
            c0 = pl.multiple_of(i * CH, CH)
            cs, cm = chunk_stats(c0, CH)
            return s + cs, jnp.maximum(m, cm)

        sum_acc, max_acc = jax.lax.fori_loop(1, n_full, body, (s0, m0),
                                             unroll=True)
    if rem > 0:
        cs, cm = chunk_stats(n_full * CH, rem)
        if sum_acc is None:
            sum_acc, max_acc = cs, cm
        else:
            sum_acc = sum_acc + cs
            max_acc = jnp.maximum(max_acc, cm)

    avg = sum_acc * (1.0 / C)                  # (NB, HW) f32 channel mean
    mx = max_acc.astype(jnp.float32)           # (NB, HW) f32 channel max
    feats = (avg, mx)                          # conv input channels 0, 1

    # ---- boundary masks from (1, HW) coordinate rows (broadcast over NB) ---
    h_row = coords_ref[0:1, :]                 # (1, HW) int32
    w_row = coords_ref[1:2, :]                 # (1, HW) int32
    wmasks = {}
    for dx in range(-PAD, PAD + 1):
        if dx == 0:
            continue
        wmasks[dx] = (w_row < W - dx) if dx > 0 else (w_row >= -dx)

    # ---- 7x7 "same" conv, 2 in-ch -> 1 out-ch ------------------------------
    # Per (c, kx): build ONE shifted+masked map (roll by -dx in the flattened
    # domain; positions whose w+dx falls outside [0, W) are zeroed), then
    # scatter its 7 weighted copies into the per-ky accumulators.
    row_acc = [None] * KSIZE
    for c in range(2):
        for kx in range(KSIZE):
            dx = kx - PAD
            if dx == 0:
                smap = feats[c]
            else:
                rolled = pltpu.roll(feats[c], shift=(-dx) % HW, axis=LANE)
                smap = jnp.where(wmasks[dx], rolled, 0.0)
            for ky in range(KSIZE):
                wgt = w_ref[c * KSIZE * KSIZE + ky * KSIZE + kx]  # SMEM scalar
                term = wgt * smap
                row_acc[ky] = term if row_acc[ky] is None else row_acc[ky] + term

    # Per ky: ONE lane roll by dy*W (a row shift in the flattened domain) and
    # ONE h-boundary mask, then accumulate.
    acc = None
    for ky in range(KSIZE):
        dy = ky - PAD
        row = row_acc[ky]
        if dy != 0:
            row = pltpu.roll(row, shift=(-dy * W) % HW, axis=LANE)
            hmask = (h_row < H - dy) if dy > 0 else (h_row >= -dy)
            row = jnp.where(hmask, row, 0.0)
        acc = row if acc is None else acc + row

    # sigmoid's exp/recip go to the EUP slot (free alongside VPU work).
    o_ref[...] = jax.nn.sigmoid(acc).astype(o_ref.dtype)


def _vmem_plan():
    """(vmem_limit_bytes, batch-block budget) tuned to the TPU generation.

    128 MiB parts (v5e/v6e): limit 96 MiB, budget 48 MiB.
    64 MiB parts (v7x) or unknown backend: limit 48 MiB, budget 24 MiB.
    """
    phys = None
    try:
        phys = int(pltpu.get_tpu_info().vmem_capacity_bytes)
    except Exception:
        phys = None
    if not phys or phys <= 0:
        phys = 64 << 20  # conservative: assume v7x-sized VMEM
    limit = max(32 << 20, min((phys * 3) // 4, 96 << 20))
    return limit, limit // 2


def _round8_up(v):
    return ((v + 7) // 8) * 8


def _pick_batch_block(N, C, HW, itemsize, budget_bytes):
    """Largest batch chunk whose VMEM footprint fits the budget.

    Footprint (per image): double-buffered native-dtype input + output blocks
    plus ~18 live f32 HW-wide working rows (feats, shifted map, 7 per-ky
    accumulators, final acc, reduction chunk, slack).
    """
    per_image = 2 * C * HW * itemsize + 2 * HW * itemsize + 18 * HW * 4
    cap = max(1, budget_bytes // per_image)
    if N < 16 and cap >= N:
        return N                      # single full-batch block (full-dim is layout-legal)
    nb = max(8, (min(cap, N) // 8) * 8)   # sublane-aligned block
    if N >= 16:
        # Guarantee >= 2 grid steps so the "parallel" batch axis is sharded
        # across both v7x TensorCores (no effect on 1-TC v5e/v6e correctness).
        nb = min(nb, _round8_up((N + 1) // 2))
    return nb


def spatial_attention(x, weight):
    """x: [N, C, H, W] (f32/bf16); weight: [1, 2, 7, 7] -> [N, 1, H, W] in x.dtype."""
    N, C, H, W = x.shape
    HW = H * W

    x_flat = x.reshape(N, C, HW)                        # free reshape, native dtype
    w_flat = weight.astype(jnp.float32).reshape(-1)     # (98,) for SMEM scalar reads

    hw = jnp.arange(HW, dtype=jnp.int32)
    coords = jnp.stack([hw // W, hw % W]).astype(jnp.int32)   # (2, HW)

    vmem_limit, budget = _vmem_plan()
    NB = _pick_batch_block(N, C, HW, jnp.dtype(x.dtype).itemsize, budget)
    grid = (pl.cdiv(N, NB),)

    out = pl.pallas_call(
        functools.partial(_sa_kernel, C=C, H=H, W=W),
        out_shape=jax.ShapeDtypeStruct((N, HW), x.dtype),
        grid=grid,
        in_specs=[
            pl.BlockSpec(memory_space=pltpu.SMEM),              # conv weights
            pl.BlockSpec((2, HW), lambda i: (0, 0)),            # lane coords
            pl.BlockSpec((NB, C, HW), lambda i: (i, 0, 0)),     # x batch chunk
        ],
        out_specs=pl.BlockSpec((NB, HW), lambda i: (i, 0)),     # lane-dense slab
        compiler_params=pltpu.CompilerParams(
            dimension_semantics=("parallel",),
            vmem_limit_bytes=vmem_limit,
        ),
    )(w_flat, coords, x_flat)

    return out.reshape(N, 1, H, W)


def init_weight(key):
    # nn.init.xavier_normal_(weight, gain=0.02) for shape (1, 2, 7, 7):
    # fan_in = 2*7*7 = 98, fan_out = 1*7*7 = 49
    fan_in = 2 * KSIZE * KSIZE
    fan_out = 1 * KSIZE * KSIZE
    std = 0.02 * math.sqrt(2.0 / (fan_in + fan_out))
    return jax.random.normal(key, (1, 2, KSIZE, KSIZE), dtype=jnp.float32) * std


def reference(x, weight):
    """Pure-JAX reference for sanity checking."""
    xf = x.astype(jnp.float32)
    avg_out = jnp.mean(xf, axis=1, keepdims=True)
    max_out = jnp.max(xf, axis=1, keepdims=True)
    feat = jnp.concatenate([avg_out, max_out], axis=1)          # (N, 2, H, W)
    y = jax.lax.conv_general_dilated(
        feat, weight.astype(jnp.float32), window_strides=(1, 1),
        padding=((PAD, PAD), (PAD, PAD)),
        dimension_numbers=("NCHW", "OIHW", "NCHW"))
    return jax.nn.sigmoid(y)


if __name__ == "__main__":
    key = jax.random.PRNGKey(0)
    kx, kw = jax.random.split(key)

    N, C, H, W = 2, 4, 16, 16
    x = jax.random.normal(kx, (N, C, H, W), dtype=jnp.float32)
    weight = init_weight(kw)

    out = jax.block_until_ready(spatial_attention(x, weight))

    ref = reference(x, weight)
    assert out.shape == (N, 1, H, W), out.shape
    assert jnp.allclose(out, ref, atol=1e-5, rtol=1e-5), float(
        jnp.max(jnp.abs(out - ref)))

    print("KERNEL_OK")
</pallas_src>

<mosaic_0001>
module attributes {stable_mosaic.version = 11 : i64} {
  func.func @_sa_kernel(%arg0: i32, %arg1: memref<98xf32, #tpu.memory_space<smem>>, %arg2: memref<2x256xi32, #tpu.memory_space<vmem>>, %arg3: memref<2x4x256xf32, #tpu.memory_space<vmem>>, %arg4: memref<2x256xf32, #tpu.memory_space<vmem>>) attributes {dimension_semantics = [#tpu.dimension_semantics<parallel>], iteration_bounds = array<i64: 1>, scalar_prefetch = 0 : i64, scratch_operands = 0 : i64, tpu.core_type = #tpu.core_type<tc>, window_params = [{transform_indices = @transform_0, window_bounds = array<i64: 98>}, {pipeline_mode = #tpu.pipeline_mode<synchronous>, transform_indices = @transform_1, window_bounds = array<i64: 2, 256>}, {transform_indices = @transform_2, window_bounds = array<i64: 2, 4, 256>}, {transform_indices = @transform_3, window_bounds = array<i64: 2, 256>}]} {
    %c0 = arith.constant 0 : index
    %c0_0 = arith.constant 0 : index
    %c0_1 = arith.constant 0 : index
    %0 = vector.load %arg3[%c0, %c0_0, %c0_1] : memref<2x4x256xf32, #tpu.memory_space<vmem>>, vector<2x4x256xf32>
    %cst = arith.constant dense<0.000000e+00> : vector<2x256xf32>
    %1 = vector.multi_reduction <add>, %0, %cst [1] : vector<2x4x256xf32> to vector<2x256xf32>
    %cst_2 = arith.constant dense<0xFF800000> : vector<2x256xf32>
    %2 = vector.multi_reduction <maximumf>, %0, %cst_2 [1] : vector<2x4x256xf32> to vector<2x256xf32>
    %cst_3 = arith.constant 2.500000e-01 : f32
    %3 = vector.broadcast %cst_3 : f32 to vector<2x256xf32>
    %4 = arith.mulf %1, %3 : vector<2x256xf32>
    %c0_4 = arith.constant 0 : index
    %c0_5 = arith.constant 0 : index
    %5 = vector.load %arg2[%c0_4, %c0_5] : memref<2x256xi32, #tpu.memory_space<vmem>>, vector<1x256xi32>
    %c1 = arith.constant 1 : index
    %c0_6 = arith.constant 0 : index
    %6 = vector.load %arg2[%c1, %c0_6] : memref<2x256xi32, #tpu.memory_space<vmem>>, vector<1x256xi32>
    %c3_i32 = arith.constant 3 : i32
    %7 = vector.broadcast %c3_i32 : i32 to vector<1x256xi32>
    %8 = arith.cmpi sge, %6, %7 : vector<1x256xi32>
    %c2_i32 = arith.constant 2 : i32
    %9 = vector.broadcast %c2_i32 : i32 to vector<1x256xi32>
    %10 = arith.cmpi sge, %6, %9 : vector<1x256xi32>
    %c1_i32 = arith.constant 1 : i32
    %11 = vector.broadcast %c1_i32 : i32 to vector<1x256xi32>
    %12 = arith.cmpi sge, %6, %11 : vector<1x256xi32>
    %c15_i32 = arith.constant 15 : i32
    %13 = vector.broadcast %c15_i32 : i32 to vector<1x256xi32>
    %14 = arith.cmpi slt, %6, %13 : vector<1x256xi32>
    %c14_i32 = arith.constant 14 : i32
    %15 = vector.broadcast %c14_i32 : i32 to vector<1x256xi32>
    %16 = arith.cmpi slt, %6, %15 : vector<1x256xi32>
    %c13_i32 = arith.constant 13 : i32
    %17 = vector.broadcast %c13_i32 : i32 to vector<1x256xi32>
    %18 = arith.cmpi slt, %6, %17 : vector<1x256xi32>
    %c3_i32_7 = arith.constant 3 : i32
    %19 = tpu.dynamic_rotate %4 by %c3_i32_7 dim 1 : vector<2x256xf32>, i32 -> vector<2x256xf32>
    %cst_8 = arith.constant 0.000000e+00 : f32
    %20 = vector.shape_cast %8 : vector<1x256xi1> to vector<1x256xi1>
    %21 = vector.broadcast %20 : vector<1x256xi1> to vector<2x256xi1>
    %22 = vector.broadcast %cst_8 : f32 to vector<2x256xf32>
    %23 = arith.select %21, %19, %22 : vector<2x256xi1>, vector<2x256xf32>
    %c0_9 = arith.constant 0 : index
    %24 = memref.load %arg1[%c0_9] : memref<98xf32, #tpu.memory_space<smem>>
    %25 = vector.broadcast %24 : f32 to vector<2x256xf32>
    %26 = arith.mulf %25, %23 : vector<2x256xf32>
    %c7 = arith.constant 7 : index
    %27 = memref.load %arg1[%c7] : memref<98xf32, #tpu.memory_space<smem>>
    %28 = vector.broadcast %27 : f32 to vector<2x256xf32>
    %29 = arith.mulf %28, %23 : vector<2x256xf32>
    %c14 = arith.constant 14 : index
    %30 = memref.load %arg1[%c14] : memref<98xf32, #tpu.memory_space<smem>>
    %31 = vector.broadcast %30 : f32 to vector<2x256xf32>
    %32 = arith.mulf %31, %23 : vector<2x256xf32>
    %c21 = arith.constant 21 : index
    %33 = memref.load %arg1[%c21] : memref<98xf32, #tpu.memory_space<smem>>
    %34 = vector.broadcast %33 : f32 to vector<2x256xf32>
    %35 = arith.mulf %34, %23 : vector<2x256xf32>
    %c28 = arith.constant 28 : index
    %36 = memref.load %arg1[%c28] : memref<98xf32, #tpu.memory_space<smem>>
    %37 = vector.broadcast %36 : f32 to vector<2x256xf32>
    %38 = arith.mulf %37, %23 : vector<2x256xf32>
    %c35 = arith.constant 35 : index
    %39 = memref.load %arg1[%c35] : memref<98xf32, #tpu.memory_space<smem>>
    %40 = vector.broadcast %39 : f32 to vector<2x256xf32>
    %41 = arith.mulf %40, %23 : vector<2x256xf32>
    %c42 = arith.constant 42 : index
    %42 = memref.load %arg1[%c42] : memref<98xf32, #tpu.memory_space<smem>>
    %43 = vector.broadcast %42 : f32 to vector<2x256xf32>
    %44 = arith.mulf %43, %23 : vector<2x256xf32>
    %c2_i32_10 = arith.constant 2 : i32
    %45 = tpu.dynamic_rotate %4 by %c2_i32_10 dim 1 : vector<2x256xf32>, i32 -> vector<2x256xf32>
    %cst_11 = arith.constant 0.000000e+00 : f32
    %46 = vector.shape_cast %10 : vector<1x256xi1> to vector<1x256xi1>
    %47 = vector.broadcast %46 : vector<1x256xi1> to vector<2x256xi1>
    %48 = vector.broadcast %cst_11 : f32 to vector<2x256xf32>
    %49 = arith.select %47, %45, %48 : vector<2x256xi1>, vector<2x256xf32>
    %c1_12 = arith.constant 1 : index
    %50 = memref.load %arg1[%c1_12] : memref<98xf32, #tpu.memory_space<smem>>
    %51 = vector.broadcast %50 : f32 to vector<2x256xf32>
    %52 = arith.mulf %51, %49 : vector<2x256xf32>
    %53 = arith.addf %26, %52 : vector<2x256xf32>
    %c8 = arith.constant 8 : index
    %54 = memref.load %arg1[%c8] : memref<98xf32, #tpu.memory_space<smem>>
    %55 = vector.broadcast %54 : f32 to vector<2x256xf32>
    %56 = arith.mulf %55, %49 : vector<2x256xf32>
    %57 = arith.addf %29, %56 : vector<2x256xf32>
    %c15 = arith.constant 15 : index
    %58 = memref.load %arg1[%c15] : memref<98xf32, #tpu.memory_space<smem>>
    %59 = vector.broadcast %58 : f32 to vector<2x256xf32>
    %60 = arith.mulf %59, %49 : vector<2x256xf32>
    %61 = arith.addf %32, %60 : vector<2x256xf32>
    %c22 = arith.constant 22 : index
    %62 = memref.load %arg1[%c22] : memref<98xf32, #tpu.memory_space<smem>>
    %63 = vector.broadcast %62 : f32 to vector<2x256xf32>
    %64 = arith.mulf %63, %49 : vector<2x256xf32>
    %65 = arith.addf %35, %64 : vector<2x256xf32>
    %c29 = arith.constant 29 : index
    %66 = memref.load %arg1[%c29] : memref<98xf32, #tpu.memory_space<smem>>
    %67 = vector.broadcast %66 : f32 to vector<2x256xf32>
    %68 = arith.mulf %67, %49 : vector<2x256xf32>
    %69 = arith.addf %38, %68 : vector<2x256xf32>
    %c36 = arith.constant 36 : index
    %70 = memref.load %arg1[%c36] : memref<98xf32, #tpu.memory_space<smem>>
    %71 = vector.broadcast %70 : f32 to vector<2x256xf32>
    %72 = arith.mulf %71, %49 : vector<2x256xf32>
    %73 = arith.addf %41, %72 : vector<2x256xf32>
    %c43 = arith.constant 43 : index
    %74 = memref.load %arg1[%c43] : memref<98xf32, #tpu.memory_space<smem>>
    %75 = vector.broadcast %74 : f32 to vector<2x256xf32>
    %76 = arith.mulf %75, %49 : vector<2x256xf32>
    %77 = arith.addf %44, %76 : vector<2x256xf32>
    %c1_i32_13 = arith.constant 1 : i32
    %78 = tpu.dynamic_rotate %4 by %c1_i32_13 dim 1 : vector<2x256xf32>, i32 -> vector<2x256xf32>
    %cst_14 = arith.constant 0.000000e+00 : f32
    %79 = vector.shape_cast %12 : vector<1x256xi1> to vector<1x256xi1>
    %80 = vector.broadcast %79 : vector<1x256xi1> to vector<2x256xi1>
    %81 = vector.broadcast %cst_14 : f32 to vector<2x256xf32>
    %82 = arith.select %80, %78, %81 : vector<2x256xi1>, vector<2x256xf32>
    %c2 = arith.constant 2 : index
    %83 = memref.load %arg1[%c2] : memref<98xf32, #tpu.memory_space<smem>>
    %84 = vector.broadcast %83 : f32 to vector<2x256xf32>
    %85 = arith.mulf %84, %82 : vector<2x256xf32>
    %86 = arith.addf %53, %85 : vector<2x256xf32>
    %c9 = arith.constant 9 : index
    %87 = memref.load %arg1[%c9] : memref<98xf32, #tpu.memory_space<smem>>
    %88 = vector.broadcast %87 : f32 to vector<2x256xf32>
    %89 = arith.mulf %88, %82 : vector<2x256xf32>
    %90 = arith.addf %57, %89 : vector<2x256xf32>
    %c16 = arith.constant 16 : index
    %91 = memref.load %arg1[%c16] : memref<98xf32, #tpu.memory_space<smem>>
    %92 = vector.broadcast %91 : f32 to vector<2x256xf32>
    %93 = arith.mulf %92, %82 : vector<2x256xf32>
    %94 = arith.addf %61, %93 : vector<2x256xf32>
    %c23 = arith.constant 23 : index
    %95 = memref.load %arg1[%c23] : memref<98xf32, #tpu.memory_space<smem>>
    %96 = vector.broadcast %95 : f32 to vector<2x256xf32>
    %97 = arith.mulf %96, %82 : vector<2x256xf32>
    %98 = arith.addf %65, %97 : vector<2x256xf32>
    %c30 = arith.constant 30 : index
    %99 = memref.load %arg1[%c30] : memref<98xf32, #tpu.memory_space<smem>>
    %100 = vector.broadcast %99 : f32 to vector<2x256xf32>
    %101 = arith.mulf %100, %82 : vector<2x256xf32>
    %102 = arith.addf %69, %101 : vector<2x256xf32>
    %c37 = arith.constant 37 : index
    %103 = memref.load %arg1[%c37] : memref<98xf32, #tpu.memory_space<smem>>
    %104 = vector.broadcast %103 : f32 to vector<2x256xf32>
    %105 = arith.mulf %104, %82 : vector<2x256xf32>
    %106 = arith.addf %73, %105 : vector<2x256xf32>
    %c44 = arith.constant 44 : index
    %107 = memref.load %arg1[%c44] : memref<98xf32, #tpu.memory_space<smem>>
    %108 = vector.broadcast %107 : f32 to vector<2x256xf32>
    %109 = arith.mulf %108, %82 : vector<2x256xf32>
    %110 = arith.addf %77, %109 : vector<2x256xf32>
    %c3 = arith.constant 3 : index
    %111 = memref.load %arg1[%c3] : memref<98xf32, #tpu.memory_space<smem>>
    %112 = vector.broadcast %111 : f32 to vector<2x256xf32>
    %113 = arith.mulf %112, %4 : vector<2x256xf32>
    %114 = arith.addf %86, %113 : vector<2x256xf32>
    %c10 = arith.constant 10 : index
    %115 = memref.load %arg1[%c10] : memref<98xf32, #tpu.memory_space<smem>>
    %116 = vector.broadcast %115 : f32 to vector<2x256xf32>
    %117 = arith.mulf %116, %4 : vector<2x256xf32>
    %118 = arith.addf %90, %117 : vector<2x256xf32>
    %c17 = arith.constant 17 : index
    %119 = memref.load %arg1[%c17] : memref<98xf32, #tpu.memory_space<smem>>
    %120 = vector.broadcast %119 : f32 to vector<2x256xf32>
    %121 = arith.mulf %120, %4 : vector<2x256xf32>
    %122 = arith.addf %94, %121 : vector<2x256xf32>
    %c24 = arith.constant 24 : index
    %123 = memref.load %arg1[%c24] : memref<98xf32, #tpu.memory_space<smem>>
    %124 = vector.broadcast %123 : f32 to vector<2x256xf32>
    %125 = arith.mulf %124, %4 : vector<2x256xf32>
    %126 = arith.addf %98, %125 : vector<2x256xf32>
    %c31 = arith.constant 31 : index
    %127 = memref.load %arg1[%c31] : memref<98xf32, #tpu.memory_space<smem>>
    %128 = vector.broadcast %127 : f32 to vector<2x256xf32>
    %129 = arith.mulf %128, %4 : vector<2x256xf32>
    %130 = arith.addf %102, %129 : vector<2x256xf32>
    %c38 = arith.constant 38 : index
    %131 = memref.load %arg1[%c38] : memref<98xf32, #tpu.memory_space<smem>>
    %132 = vector.broadcast %131 : f32 to vector<2x256xf32>
    %133 = arith.mulf %132, %4 : vector<2x256xf32>
    %134 = arith.addf %106, %133 : vector<2x256xf32>
    %c45 = arith.constant 45 : index
    %135 = memref.load %arg1[%c45] : memref<98xf32, #tpu.memory_space<smem>>
    %136 = vector.broadcast %135 : f32 to vector<2x256xf32>
    %137 = arith.mulf %136, %4 : vector<2x256xf32>
    %138 = arith.addf %110, %137 : vector<2x256xf32>
    %c255_i32 = arith.constant 255 : i32
    %139 = tpu.dynamic_rotate %4 by %c255_i32 dim 1 : vector<2x256xf32>, i32 -> vector<2x256xf32>
    %cst_15 = arith.constant 0.000000e+00 : f32
    %140 = vector.shape_cast %14 : vector<1x256xi1> to vector<1x256xi1>
    %141 = vector.broadcast %140 : vector<1x256xi1> to vector<2x256xi1>
    %142 = vector.broadcast %cst_15 : f32 to vector<2x256xf32>
    %143 = arith.select %141, %139, %142 : vector<2x256xi1>, vector<2x256xf32>
    %c4 = arith.constant 4 : index
    %144 = memref.load %arg1[%c4] : memref<98xf32, #tpu.memory_space<smem>>
    %145 = vector.broadcast %144 : f32 to vector<2x256xf32>
    %146 = arith.mulf %145, %143 : vector<2x256xf32>
    %147 = arith.addf %114, %146 : vector<2x256xf32>
    %c11 = arith.constant 11 : index
    %148 = memref.load %arg1[%c11] : memref<98xf32, #tpu.memory_space<smem>>
    %149 = vector.broadcast %148 : f32 to vector<2x256xf32>
    %150 = arith.mulf %149, %143 : vector<2x256xf32>
    %151 = arith.addf %118, %150 : vector<2x256xf32>
    %c18 = arith.constant 18 : index
    %152 = memref.load %arg1[%c18] : memref<98xf32, #tpu.memory_space<smem>>
    %153 = vector.broadcast %152 : f32 to vector<2x256xf32>
    %154 = arith.mulf %153, %143 : vector<2x256xf32>
    %155 = arith.addf %122, %154 : vector<2x256xf32>
    %c25 = arith.constant 25 : index
    %156 = memref.load %arg1[%c25] : memref<98xf32, #tpu.memory_space<smem>>
    %157 = vector.broadcast %156 : f32 to vector<2x256xf32>
    %158 = arith.mulf %157, %143 : vector<2x256xf32>
    %159 = arith.addf %126, %158 : vector<2x256xf32>
    %c32 = arith.constant 32 : index
    %160 = memref.load %arg1[%c32] : memref<98xf32, #tpu.memory_space<smem>>
    %161 = vector.broadcast %160 : f32 to vector<2x256xf32>
    %162 = arith.mulf %161, %143 : vector<2x256xf32>
    %163 = arith.addf %130, %162 : vector<2x256xf32>
    %c39 = arith.constant 39 : index
    %164 = memref.load %arg1[%c39] : memref<98xf32, #tpu.memory_space<smem>>
    %165 = vector.broadcast %164 : f32 to vector<2x256xf32>
    %166 = arith.mulf %165, %143 : vector<2x256xf32>
    %167 = arith.addf %134, %166 : vector<2x256xf32>
    %c46 = arith.constant 46 : index
    %168 = memref.load %arg1[%c46] : memref<98xf32, #tpu.memory_space<smem>>
    %169 = vector.broadcast %168 : f32 to vector<2x256xf32>
    %170 = arith.mulf %169, %143 : vector<2x256xf32>
    %171 = arith.addf %138, %170 : vector<2x256xf32>
    %c254_i32 = arith.constant 254 : i32
    %172 = tpu.dynamic_rotate %4 by %c254_i32 dim 1 : vector<2x256xf32>, i32 -> vector<2x256xf32>
    %cst_16 = arith.constant 0.000000e+00 : f32
    %173 = vector.shape_cast %16 : vector<1x256xi1> to vector<1x256xi1>
    %174 = vector.broadcast %173 : vector<1x256xi1> to vector<2x256xi1>
    %175 = vector.broadcast %cst_16 : f32 to vector<2x256xf32>
    %176 = arith.select %174, %172, %175 : vector<2x256xi1>, vector<2x256xf32>
    %c5 = arith.constant 5 : index
    %177 = memref.load %arg1[%c5] : memref<98xf32, #tpu.memory_space<smem>>
    %178 = vector.broadcast %177 : f32 to vector<2x256xf32>
    %179 = arith.mulf %178, %176 : vector<2x256xf32>
    %180 = arith.addf %147, %179 : vector<2x256xf32>
    %c12 = arith.constant 12 : index
    %181 = memref.load %arg1[%c12] : memref<98xf32, #tpu.memory_space<smem>>
    %182 = vector.broadcast %181 : f32 to vector<2x256xf32>
    %183 = arith.mulf %182, %176 : vector<2x256xf32>
    %184 = arith.addf %151, %183 : vector<2x256xf32>
    %c19 = arith.constant 19 : index
    %185 = memref.load %arg1[%c19] : memref<98xf32, #tpu.memory_space<smem>>
    %186 = vector.broadcast %185 : f32 to vector<2x256xf32>
    %187 = arith.mulf %186, %176 : vector<2x256xf32>
    %188 = arith.addf %155, %187 : vector<2x256xf32>
    %c26 = arith.constant 26 : index
    %189 = memref.load %arg1[%c26] : memref<98xf32, #tpu.memory_space<smem>>
    %190 = vector.broadcast %189 : f32 to vector<2x256xf32>
    %191 = arith.mulf %190, %176 : vector<2x256xf32>
    %192 = arith.addf %159, %191 : vector<2x256xf32>
    %c33 = arith.constant 33 : index
    %193 = memref.load %arg1[%c33] : memref<98xf32, #tpu.memory_space<smem>>
    %194 = vector.broadcast %193 : f32 to vector<2x256xf32>
    %195 = arith.mulf %194, %176 : vector<2x256xf32>
    %196 = arith.addf %163, %195 : vector<2x256xf32>
    %c40 = arith.constant 40 : index
    %197 = memref.load %arg1[%c40] : memref<98xf32, #tpu.memory_space<smem>>
    %198 = vector.broadcast %197 : f32 to vector<2x256xf32>
    %199 = arith.mulf %198, %176 : vector<2x256xf32>
    %200 = arith.addf %167, %199 : vector<2x256xf32>
    %c47 = arith.constant 47 : index
    %201 = memref.load %arg1[%c47] : memref<98xf32, #tpu.memory_space<smem>>
    %202 = vector.broadcast %201 : f32 to vector<2x256xf32>
    %203 = arith.mulf %202, %176 : vector<2x256xf32>
    %204 = arith.addf %171, %203 : vector<2x256xf32>
    %c253_i32 = arith.constant 253 : i32
    %205 = tpu.dynamic_rotate %4 by %c253_i32 dim 1 : vector<2x256xf32>, i32 -> vector<2x256xf32>
    %cst_17 = arith.constant 0.000000e+00 : f32
    %206 = vector.shape_cast %18 : vector<1x256xi1> to vector<1x256xi1>
    %207 = vector.broadcast %206 : vector<1x256xi1> to vector<2x256xi1>
    %208 = vector.broadcast %cst_17 : f32 to vector<2x256xf32>
    %209 = arith.select %207, %205, %208 : vector<2x256xi1>, vector<2x256xf32>
    %c6 = arith.constant 6 : index
    %210 = memref.load %arg1[%c6] : memref<98xf32, #tpu.memory_space<smem>>
    %211 = vector.broadcast %210 : f32 to vector<2x256xf32>
    %212 = arith.mulf %211, %209 : vector<2x256xf32>
    %213 = arith.addf %180, %212 : vector<2x256xf32>
    %c13 = arith.constant 13 : index
    %214 = memref.load %arg1[%c13] : memref<98xf32, #tpu.memory_space<smem>>
    %215 = vector.broadcast %214 : f32 to vector<2x256xf32>
    %216 = arith.mulf %215, %209 : vector<2x256xf32>
    %217 = arith.addf %184, %216 : vector<2x256xf32>
    %c20 = arith.constant 20 : index
    %218 = memref.load %arg1[%c20] : memref<98xf32, #tpu.memory_space<smem>>
    %219 = vector.broadcast %218 : f32 to vector<2x256xf32>
    %220 = arith.mulf %219, %209 : vector<2x256xf32>
    %221 = arith.addf %188, %220 : vector<2x256xf32>
    %c27 = arith.constant 27 : index
    %222 = memref.load %arg1[%c27] : memref<98xf32, #tpu.memory_space<smem>>
    %223 = vector.broadcast %222 : f32 to vector<2x256xf32>
    %224 = arith.mulf %223, %209 : vector<2x256xf32>
    %225 = arith.addf %192, %224 : vector<2x256xf32>
    %c34 = arith.constant 34 : index
    %226 = memref.load %arg1[%c34] : memref<98xf32, #tpu.memory_space<smem>>
    %227 = vector.broadcast %226 : f32 to vector<2x256xf32>
    %228 = arith.mulf %227, %209 : vector<2x256xf32>
    %229 = arith.addf %196, %228 : vector<2x256xf32>
    %c41 = arith.constant 41 : index
    %230 = memref.load %arg1[%c41] : memref<98xf32, #tpu.memory_space<smem>>
    %231 = vector.broadcast %230 : f32 to vector<2x256xf32>
    %232 = arith.mulf %231, %209 : vector<2x256xf32>
    %233 = arith.addf %200, %232 : vector<2x256xf32>
    %c48 = arith.constant 48 : index
    %234 = memref.load %arg1[%c48] : memref<98xf32, #tpu.memory_space<smem>>
    %235 = vector.broadcast %234 : f32 to vector<2x256xf32>
    %236 = arith.mulf %235, %209 : vector<2x256xf32>
    %237 = arith.addf %204, %236 : vector<2x256xf32>
    %c3_i32_18 = arith.constant 3 : i32
    %238 = tpu.dynamic_rotate %2 by %c3_i32_18 dim 1 : vector<2x256xf32>, i32 -> vector<2x256xf32>
    %cst_19 = arith.constant 0.000000e+00 : f32
    %239 = vector.shape_cast %8 : vector<1x256xi1> to vector<1x256xi1>
    %240 = vector.broadcast %239 : vector<1x256xi1> to vector<2x256xi1>
    %241 = vector.broadcast %cst_19 : f32 to vector<2x256xf32>
    %242 = arith.select %240, %238, %241 : vector<2x256xi1>, vector<2x256xf32>
    %c49 = arith.constant 49 : index
    %243 = memref.load %arg1[%c49] : memref<98xf32, #tpu.memory_space<smem>>
    %244 = vector.broadcast %243 : f32 to vector<2x256xf32>
    %245 = arith.mulf %244, %242 : vector<2x256xf32>
    %246 = arith.addf %213, %245 : vector<2x256xf32>
    %c56 = arith.constant 56 : index
    %247 = memref.load %arg1[%c56] : memref<98xf32, #tpu.memory_space<smem>>
    %248 = vector.broadcast %247 : f32 to vector<2x256xf32>
    %249 = arith.mulf %248, %242 : vector<2x256xf32>
    %250 = arith.addf %217, %249 : vector<2x256xf32>
    %c63 = arith.constant 63 : index
    %251 = memref.load %arg1[%c63] : memref<98xf32, #tpu.memory_space<smem>>
    %252 = vector.broadcast %251 : f32 to vector<2x256xf32>
    %253 = arith.mulf %252, %242 : vector<2x256xf32>
    %254 = arith.addf %221, %253 : vector<2x256xf32>
    %c70 = arith.constant 70 : index
    %255 = memref.load %arg1[%c70] : memref<98xf32, #tpu.memory_space<smem>>
    %256 = vector.broadcast %255 : f32 to vector<2x256xf32>
    %257 = arith.mulf %256, %242 : vector<2x256xf32>
    %258 = arith.addf %225, %257 : vector<2x256xf32>
    %c77 = arith.constant 77 : index
    %259 = memref.load %arg1[%c77] : memref<98xf32, #tpu.memory_space<smem>>
    %260 = vector.broadcast %259 : f32 to vector<2x256xf32>
    %261 = arith.mulf %260, %242 : vector<2x256xf32>
    %262 = arith.addf %229, %261 : vector<2x256xf32>
    %c84 = arith.constant 84 : index
    %263 = memref.load %arg1[%c84] : memref<98xf32, #tpu.memory_space<smem>>
    %264 = vector.broadcast %263 : f32 to vector<2x256xf32>
    %265 = arith.mulf %264, %242 : vector<2x256xf32>
    %266 = arith.addf %233, %265 : vector<2x256xf32>
    %c91 = arith.constant 91 : index
    %267 = memref.load %arg1[%c91] : memref<98xf32, #tpu.memory_space<smem>>
    %268 = vector.broadcast %267 : f32 to vector<2x256xf32>
    %269 = arith.mulf %268, %242 : vector<2x256xf32>
    %270 = arith.addf %237, %269 : vector<2x256xf32>
    %c2_i32_20 = arith.constant 2 : i32
    %271 = tpu.dynamic_rotate %2 by %c2_i32_20 dim 1 : vector<2x256xf32>, i32 -> vector<2x256xf32>
    %cst_21 = arith.constant 0.000000e+00 : f32
    %272 = vector.shape_cast %10 : vector<1x256xi1> to vector<1x256xi1>
    %273 = vector.broadcast %272 : vector<1x256xi1> to vector<2x256xi1>
    %274 = vector.broadcast %cst_21 : f32 to vector<2x256xf32>
    %275 = arith.select %273, %271, %274 : vector<2x256xi1>, vector<2x256xf32>
    %c50 = arith.constant 50 : index
    %276 = memref.load %arg1[%c50] : memref<98xf32, #tpu.memory_space<smem>>
    %277 = vector.broadcast %276 : f32 to vector<2x256xf32>
    %278 = arith.mulf %277, %275 : vector<2x256xf32>
    %279 = arith.addf %246, %278 : vector<2x256xf32>
    %c57 = arith.constant 57 : index
    %280 = memref.load %arg1[%c57] : memref<98xf32, #tpu.memory_space<smem>>
    %281 = vector.broadcast %280 : f32 to vector<2x256xf32>
    %282 = arith.mulf %281, %275 : vector<2x256xf32>
    %283 = arith.addf %250, %282 : vector<2x256xf32>
    %c64 = arith.constant 64 : index
    %284 = memref.load %arg1[%c64] : memref<98xf32, #tpu.memory_space<smem>>
    %285 = vector.broadcast %284 : f32 to vector<2x256xf32>
    %286 = arith.mulf %285, %275 : vector<2x256xf32>
    %287 = arith.addf %254, %286 : vector<2x256xf32>
    %c71 = arith.constant 71 : index
    %288 = memref.load %arg1[%c71] : memref<98xf32, #tpu.memory_space<smem>>
    %289 = vector.broadcast %288 : f32 to vector<2x256xf32>
    %290 = arith.mulf %289, %275 : vector<2x256xf32>
    %291 = arith.addf %258, %290 : vector<2x256xf32>
    %c78 = arith.constant 78 : index
    %292 = memref.load %arg1[%c78] : memref<98xf32, #tpu.memory_space<smem>>
    %293 = vector.broadcast %292 : f32 to vector<2x256xf32>
    %294 = arith.mulf %293, %275 : vector<2x256xf32>
    %295 = arith.addf %262, %294 : vector<2x256xf32>
    %c85 = arith.constant 85 : index
    %296 = memref.load %arg1[%c85] : memref<98xf32, #tpu.memory_space<smem>>
    %297 = vector.broadcast %296 : f32 to vector<2x256xf32>
    %298 = arith.mulf %297, %275 : vector<2x256xf32>
    %299 = arith.addf %266, %298 : vector<2x256xf32>
    %c92 = arith.constant 92 : index
    %300 = memref.load %arg1[%c92] : memref<98xf32, #tpu.memory_space<smem>>
    %301 = vector.broadcast %300 : f32 to vector<2x256xf32>
    %302 = arith.mulf %301, %275 : vector<2x256xf32>
    %303 = arith.addf %270, %302 : vector<2x256xf32>
    %c1_i32_22 = arith.constant 1 : i32
    %304 = tpu.dynamic_rotate %2 by %c1_i32_22 dim 1 : vector<2x256xf32>, i32 -> vector<2x256xf32>
    %cst_23 = arith.constant 0.000000e+00 : f32
    %305 = vector.shape_cast %12 : vector<1x256xi1> to vector<1x256xi1>
    %306 = vector.broadcast %305 : vector<1x256xi1> to vector<2x256xi1>
    %307 = vector.broadcast %cst_23 : f32 to vector<2x256xf32>
    %308 = arith.select %306, %304, %307 : vector<2x256xi1>, vector<2x256xf32>
    %c51 = arith.constant 51 : index
    %309 = memref.load %arg1[%c51] : memref<98xf32, #tpu.memory_space<smem>>
    %310 = vector.broadcast %309 : f32 to vector<2x256xf32>
    %311 = arith.mulf %310, %308 : vector<2x256xf32>
    %312 = arith.addf %279, %311 : vector<2x256xf32>
    %c58 = arith.constant 58 : index
    %313 = memref.load %arg1[%c58] : memref<98xf32, #tpu.memory_space<smem>>
    %314 = vector.broadcast %313 : f32 to vector<2x256xf32>
    %315 = arith.mulf %314, %308 : vector<2x256xf32>
    %316 = arith.addf %283, %315 : vector<2x256xf32>
    %c65 = arith.constant 65 : index
    %317 = memref.load %arg1[%c65] : memref<98xf32, #tpu.memory_space<smem>>
    %318 = vector.broadcast %317 : f32 to vector<2x256xf32>
    %319 = arith.mulf %318, %308 : vector<2x256xf32>
    %320 = arith.addf %287, %319 : vector<2x256xf32>
    %c72 = arith.constant 72 : index
    %321 = memref.load %arg1[%c72] : memref<98xf32, #tpu.memory_space<smem>>
    %322 = vector.broadcast %321 : f32 to vector<2x256xf32>
    %323 = arith.mulf %322, %308 : vector<2x256xf32>
    %324 = arith.addf %291, %323 : vector<2x256xf32>
    %c79 = arith.constant 79 : index
    %325 = memref.load %arg1[%c79] : memref<98xf32, #tpu.memory_space<smem>>
    %326 = vector.broadcast %325 : f32 to vector<2x256xf32>
    %327 = arith.mulf %326, %308 : vector<2x256xf32>
    %328 = arith.addf %295, %327 : vector<2x256xf32>
    %c86 = arith.constant 86 : index
    %329 = memref.load %arg1[%c86] : memref<98xf32, #tpu.memory_space<smem>>
    %330 = vector.broadcast %329 : f32 to vector<2x256xf32>
    %331 = arith.mulf %330, %308 : vector<2x256xf32>
    %332 = arith.addf %299, %331 : vector<2x256xf32>
    %c93 = arith.constant 93 : index
    %333 = memref.load %arg1[%c93] : memref<98xf32, #tpu.memory_space<smem>>
    %334 = vector.broadcast %333 : f32 to vector<2x256xf32>
    %335 = arith.mulf %334, %308 : vector<2x256xf32>
    %336 = arith.addf %303, %335 : vector<2x256xf32>
    %c52 = arith.constant 52 : index
    %337 = memref.load %arg1[%c52] : memref<98xf32, #tpu.memory_space<smem>>
    %338 = vector.broadcast %337 : f32 to vector<2x256xf32>
    %339 = arith.mulf %338, %2 : vector<2x256xf32>
    %340 = arith.addf %312, %339 : vector<2x256xf32>
    %c59 = arith.constant 59 : index
    %341 = memref.load %arg1[%c59] : memref<98xf32, #tpu.memory_space<smem>>
    %342 = vector.broadcast %341 : f32 to vector<2x256xf32>
    %343 = arith.mulf %342, %2 : vector<2x256xf32>
    %344 = arith.addf %316, %343 : vector<2x256xf32>
    %c66 = arith.constant 66 : index
    %345 = memref.load %arg1[%c66] : memref<98xf32, #tpu.memory_space<smem>>
    %346 = vector.broadcast %345 : f32 to vector<2x256xf32>
    %347 = arith.mulf %346, %2 : vector<2x256xf32>
    %348 = arith.addf %320, %347 : vector<2x256xf32>
    %c73 = arith.constant 73 : index
    %349 = memref.load %arg1[%c73] : memref<98xf32, #tpu.memory_space<smem>>
    %350 = vector.broadcast %349 : f32 to vector<2x256xf32>
    %351 = arith.mulf %350, %2 : vector<2x256xf32>
    %352 = arith.addf %324, %351 : vector<2x256xf32>
    %c80 = arith.constant 80 : index
    %353 = memref.load %arg1[%c80] : memref<98xf32, #tpu.memory_space<smem>>
    %354 = vector.broadcast %353 : f32 to vector<2x256xf32>
    %355 = arith.mulf %354, %2 : vector<2x256xf32>
    %356 = arith.addf %328, %355 : vector<2x256xf32>
    %c87 = arith.constant 87 : index
    %357 = memref.load %arg1[%c87] : memref<98xf32, #tpu.memory_space<smem>>
    %358 = vector.broadcast %357 : f32 to vector<2x256xf32>
    %359 = arith.mulf %358, %2 : vector<2x256xf32>
    %360 = arith.addf %332, %359 : vector<2x256xf32>
    %c94 = arith.constant 94 : index
    %361 = memref.load %arg1[%c94] : memref<98xf32, #tpu.memory_space<smem>>
    %362 = vector.broadcast %361 : f32 to vector<2x256xf32>
    %363 = arith.mulf %362, %2 : vector<2x256xf32>
    %364 = arith.addf %336, %363 : vector<2x256xf32>
    %c255_i32_24 = arith.constant 255 : i32
    %365 = tpu.dynamic_rotate %2 by %c255_i32_24 dim 1 : vector<2x256xf32>, i32 -> vector<2x256xf32>
    %cst_25 = arith.constant 0.000000e+00 : f32
    %366 = vector.shape_cast %14 : vector<1x256xi1> to vector<1x256xi1>
    %367 = vector.broadcast %366 : vector<1x256xi1> to vector<2x256xi1>
    %368 = vector.broadcast %cst_25 : f32 to vector<2x256xf32>
    %369 = arith.select %367, %365, %368 : vector<2x256xi1>, vector<2x256xf32>
    %c53 = arith.constant 53 : index
    %370 = memref.load %arg1[%c53] : memref<98xf32, #tpu.memory_space<smem>>
    %371 = vector.broadcast %370 : f32 to vector<2x256xf32>
    %372 = arith.mulf %371, %369 : vector<2x256xf32>
    %373 = arith.addf %340, %372 : vector<2x256xf32>
    %c60 = arith.constant 60 : index
    %374 = memref.load %arg1[%c60] : memref<98xf32, #tpu.memory_space<smem>>
    %375 = vector.broadcast %374 : f32 to vector<2x256xf32>
    %376 = arith.mulf %375, %369 : vector<2x256xf32>
    %377 = arith.addf %344, %376 : vector<2x256xf32>
    %c67 = arith.constant 67 : index
    %378 = memref.load %arg1[%c67] : memref<98xf32, #tpu.memory_space<smem>>
    %379 = vector.broadcast %378 : f32 to vector<2x256xf32>
    %380 = arith.mulf %379, %369 : vector<2x256xf32>
    %381 = arith.addf %348, %380 : vector<2x256xf32>
    %c74 = arith.constant 74 : index
    %382 = memref.load %arg1[%c74] : memref<98xf32, #tpu.memory_space<smem>>
    %383 = vector.broadcast %382 : f32 to vector<2x256xf32>
    %384 = arith.mulf %383, %369 : vector<2x256xf32>
    %385 = arith.addf %352, %384 : vector<2x256xf32>
    %c81 = arith.constant 81 : index
    %386 = memref.load %arg1[%c81] : memref<98xf32, #tpu.memory_space<smem>>
    %387 = vector.broadcast %386 : f32 to vector<2x256xf32>
    %388 = arith.mulf %387, %369 : vector<2x256xf32>
    %389 = arith.addf %356, %388 : vector<2x256xf32>
    %c88 = arith.constant 88 : index
    %390 = memref.load %arg1[%c88] : memref<98xf32, #tpu.memory_space<smem>>
    %391 = vector.broadcast %390 : f32 to vector<2x256xf32>
    %392 = arith.mulf %391, %369 : vector<2x256xf32>
    %393 = arith.addf %360, %392 : vector<2x256xf32>
    %c95 = arith.constant 95 : index
    %394 = memref.load %arg1[%c95] : memref<98xf32, #tpu.memory_space<smem>>
    %395 = vector.broadcast %394 : f32 to vector<2x256xf32>
    %396 = arith.mulf %395, %369 : vector<2x256xf32>
    %397 = arith.addf %364, %396 : vector<2x256xf32>
    %c254_i32_26 = arith.constant 254 : i32
    %398 = tpu.dynamic_rotate %2 by %c254_i32_26 dim 1 : vector<2x256xf32>, i32 -> vector<2x256xf32>
    %cst_27 = arith.constant 0.000000e+00 : f32
    %399 = vector.shape_cast %16 : vector<1x256xi1> to vector<1x256xi1>
    %400 = vector.broadcast %399 : vector<1x256xi1> to vector<2x256xi1>
    %401 = vector.broadcast %cst_27 : f32 to vector<2x256xf32>
    %402 = arith.select %400, %398, %401 : vector<2x256xi1>, vector<2x256xf32>
    %c54 = arith.constant 54 : index
    %403 = memref.load %arg1[%c54] : memref<98xf32, #tpu.memory_space<smem>>
    %404 = vector.broadcast %403 : f32 to vector<2x256xf32>
    %405 = arith.mulf %404, %402 : vector<2x256xf32>
    %406 = arith.addf %373, %405 : vector<2x256xf32>
    %c61 = arith.constant 61 : index
    %407 = memref.load %arg1[%c61] : memref<98xf32, #tpu.memory_space<smem>>
    %408 = vector.broadcast %407 : f32 to vector<2x256xf32>
    %409 = arith.mulf %408, %402 : vector<2x256xf32>
    %410 = arith.addf %377, %409 : vector<2x256xf32>
    %c68 = arith.constant 68 : index
    %411 = memref.load %arg1[%c68] : memref<98xf32, #tpu.memory_space<smem>>
    %412 = vector.broadcast %411 : f32 to vector<2x256xf32>
    %413 = arith.mulf %412, %402 : vector<2x256xf32>
    %414 = arith.addf %381, %413 : vector<2x256xf32>
    %c75 = arith.constant 75 : index
    %415 = memref.load %arg1[%c75] : memref<98xf32, #tpu.memory_space<smem>>
    %416 = vector.broadcast %415 : f32 to vector<2x256xf32>
    %417 = arith.mulf %416, %402 : vector<2x256xf32>
    %418 = arith.addf %385, %417 : vector<2x256xf32>
    %c82 = arith.constant 82 : index
    %419 = memref.load %arg1[%c82] : memref<98xf32, #tpu.memory_space<smem>>
    %420 = vector.broadcast %419 : f32 to vector<2x256xf32>
    %421 = arith.mulf %420, %402 : vector<2x256xf32>
    %422 = arith.addf %389, %421 : vector<2x256xf32>
    %c89 = arith.constant 89 : index
    %423 = memref.load %arg1[%c89] : memref<98xf32, #tpu.memory_space<smem>>
    %424 = vector.broadcast %423 : f32 to vector<2x256xf32>
    %425 = arith.mulf %424, %402 : vector<2x256xf32>
    %426 = arith.addf %393, %425 : vector<2x256xf32>
    %c96 = arith.constant 96 : index
    %427 = memref.load %arg1[%c96] : memref<98xf32, #tpu.memory_space<smem>>
    %428 = vector.broadcast %427 : f32 to vector<2x256xf32>
    %429 = arith.mulf %428, %402 : vector<2x256xf32>
    %430 = arith.addf %397, %429 : vector<2x256xf32>
    %c253_i32_28 = arith.constant 253 : i32
    %431 = tpu.dynamic_rotate %2 by %c253_i32_28 dim 1 : vector<2x256xf32>, i32 -> vector<2x256xf32>
    %cst_29 = arith.constant 0.000000e+00 : f32
    %432 = vector.shape_cast %18 : vector<1x256xi1> to vector<1x256xi1>
    %433 = vector.broadcast %432 : vector<1x256xi1> to vector<2x256xi1>
    %434 = vector.broadcast %cst_29 : f32 to vector<2x256xf32>
    %435 = arith.select %433, %431, %434 : vector<2x256xi1>, vector<2x256xf32>
    %c55 = arith.constant 55 : index
    %436 = memref.load %arg1[%c55] : memref<98xf32, #tpu.memory_space<smem>>
    %437 = vector.broadcast %436 : f32 to vector<2x256xf32>
    %438 = arith.mulf %437, %435 : vector<2x256xf32>
    %439 = arith.addf %406, %438 : vector<2x256xf32>
    %c62 = arith.constant 62 : index
    %440 = memref.load %arg1[%c62] : memref<98xf32, #tpu.memory_space<smem>>
    %441 = vector.broadcast %440 : f32 to vector<2x256xf32>
    %442 = arith.mulf %441, %435 : vector<2x256xf32>
    %443 = arith.addf %410, %442 : vector<2x256xf32>
    %c69 = arith.constant 69 : index
    %444 = memref.load %arg1[%c69] : memref<98xf32, #tpu.memory_space<smem>>
    %445 = vector.broadcast %444 : f32 to vector<2x256xf32>
    %446 = arith.mulf %445, %435 : vector<2x256xf32>
    %447 = arith.addf %414, %446 : vector<2x256xf32>
    %c76 = arith.constant 76 : index
    %448 = memref.load %arg1[%c76] : memref<98xf32, #tpu.memory_space<smem>>
    %449 = vector.broadcast %448 : f32 to vector<2x256xf32>
    %450 = arith.mulf %449, %435 : vector<2x256xf32>
    %451 = arith.addf %418, %450 : vector<2x256xf32>
    %c83 = arith.constant 83 : index
    %452 = memref.load %arg1[%c83] : memref<98xf32, #tpu.memory_space<smem>>
    %453 = vector.broadcast %452 : f32 to vector<2x256xf32>
    %454 = arith.mulf %453, %435 : vector<2x256xf32>
    %455 = arith.addf %422, %454 : vector<2x256xf32>
    %c90 = arith.constant 90 : index
    %456 = memref.load %arg1[%c90] : memref<98xf32, #tpu.memory_space<smem>>
    %457 = vector.broadcast %456 : f32 to vector<2x256xf32>
    %458 = arith.mulf %457, %435 : vector<2x256xf32>
    %459 = arith.addf %426, %458 : vector<2x256xf32>
    %c97 = arith.constant 97 : index
    %460 = memref.load %arg1[%c97] : memref<98xf32, #tpu.memory_space<smem>>
    %461 = vector.broadcast %460 : f32 to vector<2x256xf32>
    %462 = arith.mulf %461, %435 : vector<2x256xf32>
    %463 = arith.addf %430, %462 : vector<2x256xf32>
    %c48_i32 = arith.constant 48 : i32
    %464 = tpu.dynamic_rotate %439 by %c48_i32 dim 1 : vector<2x256xf32>, i32 -> vector<2x256xf32>
    %c3_i32_30 = arith.constant 3 : i32
    %465 = vector.broadcast %c3_i32_30 : i32 to vector<1x256xi32>
    %466 = arith.cmpi sge, %5, %465 : vector<1x256xi32>
    %cst_31 = arith.constant 0.000000e+00 : f32
    %467 = vector.shape_cast %466 : vector<1x256xi1> to vector<1x256xi1>
    %468 = vector.broadcast %467 : vector<1x256xi1> to vector<2x256xi1>
    %469 = vector.broadcast %cst_31 : f32 to vector<2x256xf32>
    %470 = arith.select %468, %464, %469 : vector<2x256xi1>, vector<2x256xf32>
    %c32_i32 = arith.constant 32 : i32
    %471 = tpu.dynamic_rotate %443 by %c32_i32 dim 1 : vector<2x256xf32>, i32 -> vector<2x256xf32>
    %c2_i32_32 = arith.constant 2 : i32
    %472 = vector.broadcast %c2_i32_32 : i32 to vector<1x256xi32>
    %473 = arith.cmpi sge, %5, %472 : vector<1x256xi32>
    %cst_33 = arith.constant 0.000000e+00 : f32
    %474 = vector.shape_cast %473 : vector<1x256xi1> to vector<1x256xi1>
    %475 = vector.broadcast %474 : vector<1x256xi1> to vector<2x256xi1>
    %476 = vector.broadcast %cst_33 : f32 to vector<2x256xf32>
    %477 = arith.select %475, %471, %476 : vector<2x256xi1>, vector<2x256xf32>
    %478 = arith.addf %470, %477 : vector<2x256xf32>
    %c16_i32 = arith.constant 16 : i32
    %479 = tpu.dynamic_rotate %447 by %c16_i32 dim 1 : vector<2x256xf32>, i32 -> vector<2x256xf32>
    %c1_i32_34 = arith.constant 1 : i32
    %480 = vector.broadcast %c1_i32_34 : i32 to vector<1x256xi32>
    %481 = arith.cmpi sge, %5, %480 : vector<1x256xi32>
    %cst_35 = arith.constant 0.000000e+00 : f32
    %482 = vector.shape_cast %481 : vector<1x256xi1> to vector<1x256xi1>
    %483 = vector.broadcast %482 : vector<1x256xi1> to vector<2x256xi1>
    %484 = vector.broadcast %cst_35 : f32 to vector<2x256xf32>
    %485 = arith.select %483, %479, %484 : vector<2x256xi1>, vector<2x256xf32>
    %486 = arith.addf %478, %485 : vector<2x256xf32>
    %487 = arith.addf %486, %451 : vector<2x256xf32>
    %c240_i32 = arith.constant 240 : i32
    %488 = tpu.dynamic_rotate %455 by %c240_i32 dim 1 : vector<2x256xf32>, i32 -> vector<2x256xf32>
    %c15_i32_36 = arith.constant 15 : i32
    %489 = vector.broadcast %c15_i32_36 : i32 to vector<1x256xi32>
    %490 = arith.cmpi slt, %5, %489 : vector<1x256xi32>
    %cst_37 = arith.constant 0.000000e+00 : f32
    %491 = vector.shape_cast %490 : vector<1x256xi1> to vector<1x256xi1>
    %492 = vector.broadcast %491 : vector<1x256xi1> to vector<2x256xi1>
    %493 = vector.broadcast %cst_37 : f32 to vector<2x256xf32>
    %494 = arith.select %492, %488, %493 : vector<2x256xi1>, vector<2x256xf32>
    %495 = arith.addf %487, %494 : vector<2x256xf32>
    %c224_i32 = arith.constant 224 : i32
    %496 = tpu.dynamic_rotate %459 by %c224_i32 dim 1 : vector<2x256xf32>, i32 -> vector<2x256xf32>
    %c14_i32_38 = arith.constant 14 : i32
    %497 = vector.broadcast %c14_i32_38 : i32 to vector<1x256xi32>
    %498 = arith.cmpi slt, %5, %497 : vector<1x256xi32>
    %cst_39 = arith.constant 0.000000e+00 : f32
    %499 = vector.shape_cast %498 : vector<1x256xi1> to vector<1x256xi1>
    %500 = vector.broadcast %499 : vector<1x256xi1> to vector<2x256xi1>
    %501 = vector.broadcast %cst_39 : f32 to vector<2x256xf32>
    %502 = arith.select %500, %496, %501 : vector<2x256xi1>, vector<2x256xf32>
    %503 = arith.addf %495, %502 : vector<2x256xf32>
    %c208_i32 = arith.constant 208 : i32
    %504 = tpu.dynamic_rotate %463 by %c208_i32 dim 1 : vector<2x256xf32>, i32 -> vector<2x256xf32>
    %c13_i32_40 = arith.constant 13 : i32
    %505 = vector.broadcast %c13_i32_40 : i32 to vector<1x256xi32>
    %506 = arith.cmpi slt, %5, %505 : vector<1x256xi32>
    %cst_41 = arith.constant 0.000000e+00 : f32
    %507 = vector.shape_cast %506 : vector<1x256xi1> to vector<1x256xi1>
    %508 = vector.broadcast %507 : vector<1x256xi1> to vector<2x256xi1>
    %509 = vector.broadcast %cst_41 : f32 to vector<2x256xf32>
    %510 = arith.select %508, %504, %509 : vector<2x256xi1>, vector<2x256xf32>
    %511 = arith.addf %503, %510 : vector<2x256xf32>
    %512 = arith.negf %511 : vector<2x256xf32>
    %513 = math.exp %512 : vector<2x256xf32>
    %cst_42 = arith.constant 1.000000e+00 : f32
    %514 = vector.broadcast %cst_42 : f32 to vector<2x256xf32>
    %515 = arith.addf %514, %513 : vector<2x256xf32>
    %516 = arith.divf %514, %515 : vector<2x256xf32>
    %c0_43 = arith.constant 0 : index
    %c0_44 = arith.constant 0 : index
    %517 = vector.load %arg4[%c0_43, %c0_44] : memref<2x256xf32, #tpu.memory_space<vmem>>, vector<2x256xf32>
    tpu.vector_store %arg4[%c0_43, %c0_44], %516 {strides = array<i32>} : memref<2x256xf32, #tpu.memory_space<vmem>>, vector<2x256xf32>,
    return
  }
  func.func @transform_0(%arg0: i32) -> i32 {
    %c0_i32 = arith.constant 0 : i32
    %c0_i32_0 = arith.constant 0 : i32
    return %c0_i32 : i32
  }
  func.func @transform_1(%arg0: i32) -> (i32, i32) {
    %c0_i32 = arith.constant 0 : i32
    %c0_i32_0 = arith.constant 0 : i32
    %c0_i32_1 = arith.constant 0 : i32
    return %c0_i32, %c0_i32_0 : i32, i32
  }
  func.func @transform_2(%arg0: i32) -> (i32, i32, i32) {
    %c0_i32 = arith.constant 0 : i32
    %c0_i32_0 = arith.constant 0 : i32
    %c0_i32_1 = arith.constant 0 : i32
    return %arg0, %c0_i32, %c0_i32_0 : i32, i32, i32
  }
  func.func @transform_3(%arg0: i32) -> (i32, i32) {
    %c0_i32 = arith.constant 0 : i32
    %c0_i32_0 = arith.constant 0 : i32
    return %arg0, %c0_i32 : i32, i32
  }
}

</mosaic_0001>

<llo_original>
// kernel: tpu_custom_call.1
$region0: #{tpu_custom_call.1}
  #allocation0 [shape = 'u32[]', space=smem, size = 0x4, offset = 0x4, fixed_abs, tag = 'smem constant byte address 0x4 - core index']
  #allocation1 [shape = 'u32[144,128]{1,0:T(1,128)}', space=vmem, size = 0x12000, scoped, tag = 'internal scratch']
  %s0 = inlined_call_operand.hbm [shape: f32[98], index: 0, kind: input, shape index: {}]
  %s1 = inlined_call_operand.hbm [shape: s32[2,256], index: 1, kind: input, shape index: {}]
  %s2 = inlined_call_operand.hbm [shape: f32[2,4,256], index: 2, kind: input, shape index: {}]
  %s3 = inlined_call_operand.hbm [shape: f32[2,256], index: 3, kind: output, shape index: {}]
  %s4 = sld [smem:[#allocation0]]
  $region34: #{tpu_custom_call.1} parent=0
    _
  %s6 = ssub.s32 1, %s4
  %s7 = scalar_select 0, %s6, %s4
  $region1: #{tpu_custom_call.1} parent=0
    #allocation2 [shape = 'u8[512]{0}', space=smem, size = 0x200, scoped, tag = 'input window, operand 0, single buffered']
    #allocation3 [shape = 's32[1]{0}', space=sflag, size = 0x4, scoped, tag = 'scoped memory for tpu_custom_call.1']
    #allocation4 [shape = 's32[1]{0}', space=sflag, size = 0x4, scoped, tag = 'scoped memory for tpu_custom_call.1']
    #allocation5 [shape = 's32[1]{0}', space=sflag, size = 0x4, scoped, tag = 'scoped memory for tpu_custom_call.1']
    #allocation6 [shape = 'u8[2048]{0}', space=vmem, size = 0x800, scoped, tag = 'input window, operand 1, single buffered']
    #allocation7 [shape = 'u8[8192]{0}', space=vmem, size = 0x2000, scoped, tag = 'input window, operand 2, single buffered']
    #allocation8 [shape = 's32[1]{0}', space=sflag, size = 0x4, scoped, tag = 'scoped memory for tpu_custom_call.1']
    #allocation9 [shape = 'u8[2048]{0}', space=vmem, size = 0x800, scoped, tag = 'output window, operand 0, single buffered']
    %8 = vsyncpa [#allocation5], 0
    %9 = vsyncpa [#allocation3], 0
    %10 = vsyncpa [#allocation8], 0
    %11 = vsyncpa [#allocation4], 0
    // Predicated region
    $region2: #{tpu_custom_call.1} parent=1 // pred_check
      _
    $region3: #{tpu_custom_call.1} parent=1 // pred_check_branch
      %13 = sbr.rel (0) target = $region5
    $region4: #{tpu_custom_call.1} parent=1 // pred_region
      %s15 = ssub.s32 16, 16
      %16 = vsyncadd [#allocation5], %s15
      %19 = dma.hbm_to_smem %s0, 16, [#allocation2], [#allocation5]
    $region5: #{tpu_custom_call.1} parent=1 // pred_fallthru
      _
    // Predicated region
    $region6: #{tpu_custom_call.1} parent=1 // pred_check
      _
    $region7: #{tpu_custom_call.1} parent=1 // pred_check_branch
      %21 = sbr.rel (0) target = $region9
    $region8: #{tpu_custom_call.1} parent=1 // pred_region
      %s23 = ssub.s32 64, 64
      %24 = vsyncadd [#allocation3], %s23
      %s26 = sshll.u32 [#allocation6], 4
      %s27 = int_to_ptr.vmem [resolvable:$true] %s26
      %29 = dma.hbm_to_vmem [thread:$0]  %s1, 64, %s27, [#allocation3]
    $region9: #{tpu_custom_call.1} parent=1 // pred_fallthru
      _
    // Predicated region
    $region10: #{tpu_custom_call.1} parent=1 // pred_check
      _
    $region11: #{tpu_custom_call.1} parent=1 // pred_check_branch
      %31 = sbr.rel (0) target = $region13
    $region12: #{tpu_custom_call.1} parent=1 // pred_region
      %s33 = ssub.s32 256, 256
      %34 = vsyncadd [#allocation8], %s33
      %s35 = sshll.u32 [#allocation7], 4
      %s36 = int_to_ptr.vmem [resolvable:$true] %s35
      %41 = dma.hbm_to_vmem [thread:$0]  %s2, 256, %s36, [#allocation8], 128, 128, 8
    $region13: #{tpu_custom_call.1} parent=1 // pred_fallthru
      _
    // Predicated region
    $region14: #{tpu_custom_call.1} parent=1 // pred_check
      _
    $region15: #{tpu_custom_call.1} parent=1 // pred_check_branch
      %43 = sbr.rel (0) target = $region17
    $region16: #{tpu_custom_call.1} parent=1 // pred_region
      %44 = dma.done [#allocation5], 16
    $region17: #{tpu_custom_call.1} parent=1 // pred_fallthru
      _
    // Predicated region
    $region18: #{tpu_custom_call.1} parent=1 // pred_check
      _
    $region19: #{tpu_custom_call.1} parent=1 // pred_check_branch
      %46 = sbr.rel (0) target = $region21
    $region20: #{tpu_custom_call.1} parent=1 // pred_region
      %47 = dma.done [#allocation3], 64
    $region21: #{tpu_custom_call.1} parent=1 // pred_fallthru
      _
    // Predicated region
    $region22: #{tpu_custom_call.1} parent=1 // pred_check
      _
    $region23: #{tpu_custom_call.1} parent=1 // pred_check_branch
      %49 = sbr.rel (0) target = $region25
    $region24: #{tpu_custom_call.1} parent=1 // pred_region
      %50 = dma.done [#allocation8], 256
    $region25: #{tpu_custom_call.1} parent=1 // pred_fallthru
      _
    %51 = sfence
    %v52 = vld [vmem:[#allocation7] sm:$0xff]
    %v53 = vld [vmem:[#allocation7 + $0x8] sm:$0xff]
    %v56 = vcombine.high %v52, %v52
    %v57 = vcombine.high %v53, %v53
    %vm60 = vcmask 1043456
    %v61 = vsel %vm60, %v52, 0.0
    %v62 = vrot.slane %v61, 4
    %v63 = vadd.f32 %v61, %v62
    %v64 = vrot.slane %v63, 2
    %v65 = vadd.f32 %v63, %v64
    %v66 = vrot.slane %v65, 1
    %v67 = vadd.f32 %v65, %v66
    %v68 = vsel %vm60, %v56, 0.0
    %v69 = vrot.slane %v68, 4
    %v70 = vadd.f32 %v68, %v69
    %v71 = vrot.slane %v70, 2
    %v72 = vadd.f32 %v70, %v71
    %v73 = vrot.slane %v72, 1
    %v74 = vadd.f32 %v72, %v73
    %v75 = vsel %vm60, %v53, 0.0
    %v76 = vrot.slane %v75, 4
    %v77 = vadd.f32 %v75, %v76
    %v78 = vrot.slane %v77, 2
    %v79 = vadd.f32 %v77, %v78
    %v80 = vrot.slane %v79, 1
    %v81 = vadd.f32 %v79, %v80
    %v82 = vsel %vm60, %v57, 0.0
    %v83 = vrot.slane %v82, 4
    %v84 = vadd.f32 %v82, %v83
    %v85 = vrot.slane %v84, 2
    %v86 = vadd.f32 %v84, %v85
    %v87 = vrot.slane %v86, 1
    %v88 = vadd.f32 %v86, %v87
    %v89 = vsel %vm60, %v52, -inf
    %v90 = vrot.slane %v89, 4
    %v91 = vmax.f32 %v89, %v90
    %v92 = vrot.slane %v91, 2
    %v93 = vmax.f32 %v91, %v92
    %v94 = vrot.slane %v93, 1
    %v95 = vmax.f32 %v93, %v94
    %v96 = vsel %vm60, %v56, -inf
    %v97 = vrot.slane %v96, 4
    %v98 = vmax.f32 %v96, %v97
    %v99 = vrot.slane %v98, 2
    %v100 = vmax.f32 %v98, %v99
    %v101 = vrot.slane %v100, 1
    %v102 = vmax.f32 %v100, %v101
    %v103 = vsel %vm60, %v53, -inf
    %v104 = vrot.slane %v103, 4
    %v105 = vmax.f32 %v103, %v104
    %v106 = vrot.slane %v105, 2
    %v107 = vmax.f32 %v105, %v106
    %v108 = vrot.slane %v107, 1
    %v109 = vmax.f32 %v107, %v108
    %v110 = vsel %vm60, %v57, -inf
    %v111 = vrot.slane %v110, 4
    %v112 = vmax.f32 %v110, %v111
    %v113 = vrot.slane %v112, 2
    %v114 = vmax.f32 %v112, %v113
    %v115 = vrot.slane %v114, 1
    %v116 = vmax.f32 %v114, %v115
    %v117 = vmul.f32 %v67, 0.25
    %v118 = vmul.f32 %v74, 0.25
    %v119 = vmul.f32 %v81, 0.25
    %v120 = vmul.f32 %v88, 0.25
    %v121 = vld [vmem:[#allocation6] ss:$2 sm:$0x3]
    %s122 = scalar_lea.vmem [#allocation6], 1
    %v123 = vld [vmem:[%s122] ss:$2 sm:$0x3]
    %vm124 = vcmp.ge.s32.totalorder %v123, 3
    %vm125 = vcmp.ge.s32.totalorder %v123, 2
    %vm126 = vcmp.ge.s32.totalorder %v123, 1
    %vm127 = vcmp.lt.s32.totalorder %v123, 15
    %vm128 = vcmp.lt.s32.totalorder %v123, 14
    %vm129 = vcmp.lt.s32.totalorder %v123, 13
    %vm134 = vcmask 1041409
    %v135 = vsel %vm134, %v119, %v117
    %v136 = vsel %vm134, %v120, %v118
    %139 = vrot.lane.b32.xlu0 %v135, 3
    %v140 = vpop.permute.xlu0 %139
    %141 = vrot.lane.b32.xlu0 %v136, 3
    %v142 = vpop.permute.xlu0 %141
    %v143 = vlaneseq
    %v144 = vand.u32 %v143, 127
    %vm145 = vcmp.lt.s32.totalorder %v144, 3
    %v146 = vsel %vm145, %v140, %v142
    %v147 = vsel %vm145, %v142, %v140
    %v148 = vsel %vm124, 1, 0
    %v149 = vlaneseq
    %v150 = vshrl.u32 %v149, 7
    %v151 = vsub.s32 0, %v150
    %v152 = vrot.slane %v148, %v151
    %v153 = vlaneseq
    %v154 = vshrl.u32 %v153, 7
    %v155 = vsub.s32 1, %v154
    %v156 = vrot.slane %v148, %v155
    %vm157 = vcmp.eq.s32.totalorder %v152, 1
    %vm158 = vcmp.eq.s32.totalorder %v156, 1
    %v159 = vsel %vm157, %v147, 0.0
    %v160 = vsel %vm158, %v146, 0.0
    %s161 = sld [smem:[#allocation2]]
    %v162 = vstv %s161
    %v163 = vmul.f32 %v162, %v159
    %v164 = vmul.f32 %v162, %v160
    %s165 = sld [smem:[#allocation2 + $0x7]]
    %v166 = vstv %s165
    %v167 = vmul.f32 %v166, %v159
    %v168 = vmul.f32 %v166, %v160
    %s169 = sld [smem:[#allocation2 + $0xe]]
    %v170 = vstv %s169
    %v171 = vmul.f32 %v170, %v159
    %v172 = vmul.f32 %v170, %v160
    %s173 = sld [smem:[#allocation2 + $0x15]]
    %v174 = vstv %s173
    %v175 = vmul.f32 %v174, %v159
    %v176 = vmul.f32 %v174, %v160
    %s177 = sld [smem:[#allocation2 + $0x1c]]
    %v178 = vstv %s177
    %v179 = vmul.f32 %v178, %v159
    %v180 = vmul.f32 %v178, %v160
    %s181 = sld [smem:[#allocation2 + $0x23]]
    %v182 = vstv %s181
    %v183 = vmul.f32 %v182, %v159
    %v184 = vmul.f32 %v182, %v160
    %s185 = sld [smem:[#allocation2 + $0x2a]]
    %v186 = vstv %s185
    %v187 = vmul.f32 %v186, %v159
    %v188 = vmul.f32 %v186, %v160
    %189 = vrot.lane.b32.xlu0 %v135, 2
    %v190 = vpop.permute.xlu0 %189
    %191 = vrot.lane.b32.xlu0 %v136, 2
    %v192 = vpop.permute.xlu0 %191
    %vm193 = vcmp.lt.s32.totalorder %v144, 2
    %v194 = vsel %vm193, %v190, %v192
    %v195 = vsel %vm193, %v192, %v190
    %v196 = vsel %vm125, 1, 0
    %v197 = vlaneseq
    %v198 = vshrl.u32 %v197, 7
    %v199 = vsub.s32 0, %v198
    %v200 = vrot.slane %v196, %v199
    %v201 = vlaneseq
    %v202 = vshrl.u32 %v201, 7
    %v203 = vsub.s32 1, %v202
    %v204 = vrot.slane %v196, %v203
    %vm205 = vcmp.eq.s32.totalorder %v200, 1
    %vm206 = vcmp.eq.s32.totalorder %v204, 1
    %v207 = vsel %vm205, %v195, 0.0
    %v208 = vsel %vm206, %v194, 0.0
    %s209 = sld [smem:[#allocation2 + $0x1]]
    %v210 = vstv %s209
    %v211 = vmul.f32 %v210, %v207
    %v212 = vmul.f32 %v210, %v208
    %v213 = vadd.f32 %v163, %v211
    %v214 = vadd.f32 %v164, %v212
    %s215 = sld [smem:[#allocation2 + $0x8]]
    %v216 = vstv %s215
    %v217 = vmul.f32 %v216, %v207
    %v218 = vmul.f32 %v216, %v208
    %v219 = vadd.f32 %v167, %v217
    %v220 = vadd.f32 %v168, %v218
    %s221 = sld [smem:[#allocation2 + $0xf]]
    %v222 = vstv %s221
    %v223 = vmul.f32 %v222, %v207
    %v224 = vmul.f32 %v222, %v208
    %v225 = vadd.f32 %v171, %v223
    %v226 = vadd.f32 %v172, %v224
    %s227 = sld [smem:[#allocation2 + $0x16]]
    %v228 = vstv %s227
    %v229 = vmul.f32 %v228, %v207
    %v230 = vmul.f32 %v228, %v208
    %v231 = vadd.f32 %v175, %v229
    %v232 = vadd.f32 %v176, %v230
    %s233 = sld [smem:[#allocation2 + $0x1d]]
    %v234 = vstv %s233
    %v235 = vmul.f32 %v234, %v207
    %v236 = vmul.f32 %v234, %v208
    %v237 = vadd.f32 %v179, %v235
    %v238 = vadd.f32 %v180, %v236
    %s239 = sld [smem:[#allocation2 + $0x24]]
    %v240 = vstv %s239
    %v241 = vmul.f32 %v240, %v207
    %v242 = vmul.f32 %v240, %v208
    %v243 = vadd.f32 %v183, %v241
    %v244 = vadd.f32 %v184, %v242
    %s245 = sld [smem:[#allocation2 + $0x2b]]
    %v246 = vstv %s245
    %v247 = vmul.f32 %v246, %v207
    %v248 = vmul.f32 %v246, %v208
    %v249 = vadd.f32 %v187, %v247
    %v250 = vadd.f32 %v188, %v248
    %251 = vrot.lane.b32.xlu0 %v135, 1
    %v252 = vpop.permute.xlu0 %251
    %253 = vrot.lane.b32.xlu0 %v136, 1
    %v254 = vpop.permute.xlu0 %253
    %vm255 = vcmp.lt.s32.totalorder %v144, 1
    %v256 = vsel %vm255, %v252, %v254
    %v257 = vsel %vm255, %v254, %v252
    %v258 = vsel %vm126, 1, 0
    %v259 = vlaneseq
    %v260 = vshrl.u32 %v259, 7
    %v261 = vsub.s32 0, %v260
    %v262 = vrot.slane %v258, %v261
    %v263 = vlaneseq
    %v264 = vshrl.u32 %v263, 7
    %v265 = vsub.s32 1, %v264
    %v266 = vrot.slane %v258, %v265
    %vm267 = vcmp.eq.s32.totalorder %v262, 1
    %vm268 = vcmp.eq.s32.totalorder %v266, 1
    %v269 = vsel %vm267, %v257, 0.0
    %v270 = vsel %vm268, %v256, 0.0
    %s271 = sld [smem:[#allocation2 + $0x2]]
    %v272 = vstv %s271
    %v273 = vmul.f32 %v272, %v269
    %v274 = vmul.f32 %v272, %v270
    %v275 = vadd.f32 %v213, %v273
    %v276 = vadd.f32 %v214, %v274
    %s277 = sld [smem:[#allocation2 + $0x9]]
    %v278 = vstv %s277
    %v279 = vmul.f32 %v278, %v269
    %v280 = vmul.f32 %v278, %v270
    %v281 = vadd.f32 %v219, %v279
    %v282 = vadd.f32 %v220, %v280
    %s283 = sld [smem:[#allocation2 + $0x10]]
    %v284 = vstv %s283
    %v285 = vmul.f32 %v284, %v269
    %v286 = vmul.f32 %v284, %v270
    %v287 = vadd.f32 %v225, %v285
    %v288 = vadd.f32 %v226, %v286
    %s289 = sld [smem:[#allocation2 + $0x17]]
    %v290 = vstv %s289
    %v291 = vmul.f32 %v290, %v269
    %v292 = vmul.f32 %v290, %v270
    %v293 = vadd.f32 %v231, %v291
    %v294 = vadd.f32 %v232, %v292
    %s295 = sld [smem:[#allocation2 + $0x1e]]
    %v296 = vstv %s295
    %v297 = vmul.f32 %v296, %v269
    %v298 = vmul.f32 %v296, %v270
    %v299 = vadd.f32 %v237, %v297
    %v300 = vadd.f32 %v238, %v298
    %s301 = sld [smem:[#allocation2 + $0x25]]
    %v302 = vstv %s301
    %v303 = vmul.f32 %v302, %v269
    %v304 = vmul.f32 %v302, %v270
    %v305 = vadd.f32 %v243, %v303
    %v306 = vadd.f32 %v244, %v304
    %s307 = sld [smem:[#allocation2 + $0x2c]]
    %v308 = vstv %s307
    %v309 = vmul.f32 %v308, %v269
    %v310 = vmul.f32 %v308, %v270
    %v311 = vadd.f32 %v249, %v309
    %v312 = vadd.f32 %v250, %v310
    %s313 = sld [smem:[#allocation2 + $0x3]]
    %v314 = vstv %s313
    %v315 = vmul.f32 %v314, %v117
    %v316 = vmul.f32 %v314, %v118
    %v317 = vmul.f32 %v314, %v119
    %v318 = vmul.f32 %v314, %v120
    %v323 = vsel %vm134, %v317, %v315
    %v324 = vsel %vm134, %v318, %v316
    %v327 = vadd.f32 %v275, %v323
    %v328 = vadd.f32 %v276, %v324
    %s329 = sld [smem:[#allocation2 + $0xa]]
    %v330 = vstv %s329
    %v331 = vmul.f32 %v330, %v117
    %v332 = vmul.f32 %v330, %v118
    %v333 = vmul.f32 %v330, %v119
    %v334 = vmul.f32 %v330, %v120
    %v339 = vsel %vm134, %v333, %v331
    %v340 = vsel %vm134, %v334, %v332
    %v343 = vadd.f32 %v281, %v339
    %v344 = vadd.f32 %v282, %v340
    %s345 = sld [smem:[#allocation2 + $0x11]]
    %v346 = vstv %s345
    %v347 = vmul.f32 %v346, %v117
    %v348 = vmul.f32 %v346, %v118
    %v349 = vmul.f32 %v346, %v119
    %v350 = vmul.f32 %v346, %v120
    %v355 = vsel %vm134, %v349, %v347
    %v356 = vsel %vm134, %v350, %v348
    %v359 = vadd.f32 %v287, %v355
    %v360 = vadd.f32 %v288, %v356
    %s361 = sld [smem:[#allocation2 + $0x18]]
    %v362 = vstv %s361
    %v363 = vmul.f32 %v362, %v117
    %v364 = vmul.f32 %v362, %v118
    %v365 = vmul.f32 %v362, %v119
    %v366 = vmul.f32 %v362, %v120
    %v371 = vsel %vm134, %v365, %v363
    %v372 = vsel %vm134, %v366, %v364
    %v375 = vadd.f32 %v293, %v371
    %v376 = vadd.f32 %v294, %v372
    %s377 = sld [smem:[#allocation2 + $0x1f]]
    %v378 = vstv %s377
    %v379 = vmul.f32 %v378, %v117
    %v380 = vmul.f32 %v378, %v118
    %v381 = vmul.f32 %v378, %v119
    %v382 = vmul.f32 %v378, %v120
    %v387 = vsel %vm134, %v381, %v379
    %v388 = vsel %vm134, %v382, %v380
    %v391 = vadd.f32 %v299, %v387
    %v392 = vadd.f32 %v300, %v388
    %s393 = sld [smem:[#allocation2 + $0x26]]
    %v394 = vstv %s393
    %v395 = vmul.f32 %v394, %v117
    %v396 = vmul.f32 %v394, %v118
    %v397 = vmul.f32 %v394, %v119
    %v398 = vmul.f32 %v394, %v120
    %v403 = vsel %vm134, %v397, %v395
    %v404 = vsel %vm134, %v398, %v396
    %v407 = vadd.f32 %v305, %v403
    %v408 = vadd.f32 %v306, %v404
    %s409 = sld [smem:[#allocation2 + $0x2d]]
    %v410 = vstv %s409
    %v411 = vmul.f32 %v410, %v117
    %v412 = vmul.f32 %v410, %v118
    %v413 = vmul.f32 %v410, %v119
    %v414 = vmul.f32 %v410, %v120
    %v419 = vsel %vm134, %v413, %v411
    %v420 = vsel %vm134, %v414, %v412
    %v423 = vadd.f32 %v311, %v419
    %v424 = vadd.f32 %v312, %v420
    %425 = vrot.lane.b32.xlu0 %v135, 127
    %v426 = vpop.permute.xlu0 %425
    %427 = vrot.lane.b32.xlu0 %v136, 127
    %v428 = vpop.permute.xlu0 %427
    %vm429 = vcmp.lt.s32.totalorder %v144, 127
    %v430 = vsel %vm429, %v426, %v428
    %v431 = vsel %vm429, %v428, %v426
    %v432 = vsel %vm127, 1, 0
    %v433 = vlaneseq
    %v434 = vshrl.u32 %v433, 7
    %v435 = vsub.s32 0, %v434
    %v436 = vrot.slane %v432, %v435
    %v437 = vlaneseq
    %v438 = vshrl.u32 %v437, 7
    %v439 = vsub.s32 1, %v438
    %v440 = vrot.slane %v432, %v439
    %vm441 = vcmp.eq.s32.totalorder %v436, 1
    %vm442 = vcmp.eq.s32.totalorder %v440, 1
    %v443 = vsel %vm441, %v430, 0.0
    %v444 = vsel %vm442, %v431, 0.0
    %s445 = sld [smem:[#allocation2 + $0x4]]
    %v446 = vstv %s445
    %v447 = vmul.f32 %v446, %v443
    %v448 = vmul.f32 %v446, %v444
    %v449 = vadd.f32 %v327, %v447
    %v450 = vadd.f32 %v328, %v448
    %s451 = sld [smem:[#allocation2 + $0xb]]
    %v452 = vstv %s451
    %v453 = vmul.f32 %v452, %v443
    %v454 = vmul.f32 %v452, %v444
    %v455 = vadd.f32 %v343, %v453
    %v456 = vadd.f32 %v344, %v454
    %s457 = sld [smem:[#allocation2 + $0x12]]
    %v458 = vstv %s457
    %v459 = vmul.f32 %v458, %v443
    %v460 = vmul.f32 %v458, %v444
    %v461 = vadd.f32 %v359, %v459
    %v462 = vadd.f32 %v360, %v460
    %s463 = sld [smem:[#allocation2 + $0x19]]
    %v464 = vstv %s463
    %v465 = vmul.f32 %v464, %v443
    %v466 = vmul.f32 %v464, %v444
    %v467 = vadd.f32 %v375, %v465
    %v468 = vadd.f32 %v376, %v466
    %s469 = sld [smem:[#allocation2 + $0x20]]
    %v470 = vstv %s469
    %v471 = vmul.f32 %v470, %v443
    %v472 = vmul.f32 %v470, %v444
    %v473 = vadd.f32 %v391, %v471
    %v474 = vadd.f32 %v392, %v472
    %s475 = sld [smem:[#allocation2 + $0x27]]
    %v476 = vstv %s475
    %v477 = vmul.f32 %v476, %v443
    %v478 = vmul.f32 %v476, %v444
    %v479 = vadd.f32 %v407, %v477
    %v480 = vadd.f32 %v408, %v478
    %s481 = sld [smem:[#allocation2 + $0x2e]]
    %v482 = vstv %s481
    %v483 = vmul.f32 %v482, %v443
    %v484 = vmul.f32 %v482, %v444
    %v485 = vadd.f32 %v423, %v483
    %v486 = vadd.f32 %v424, %v484
    %487 = vrot.lane.b32.xlu0 %v135, 126
    %v488 = vpop.permute.xlu0 %487
    %489 = vrot.lane.b32.xlu0 %v136, 126
    %v490 = vpop.permute.xlu0 %489
    %vm491 = vcmp.lt.s32.totalorder %v144, 126
    %v492 = vsel %vm491, %v488, %v490
    %v493 = vsel %vm491, %v490, %v488
    %v494 = vsel %vm128, 1, 0
    %v495 = vlaneseq
    %v496 = vshrl.u32 %v495, 7
    %v497 = vsub.s32 0, %v496
    %v498 = vrot.slane %v494, %v497
    %v499 = vlaneseq
    %v500 = vshrl.u32 %v499, 7
    %v501 = vsub.s32 1, %v500
    %v502 = vrot.slane %v494, %v501
    %vm503 = vcmp.eq.s32.totalorder %v498, 1
    %vm504 = vcmp.eq.s32.totalorder %v502, 1
    %v505 = vsel %vm503, %v492, 0.0
    %v506 = vsel %vm504, %v493, 0.0
    %s507 = sld [smem:[#allocation2 + $0x5]]
    %v508 = vstv %s507
    %v509 = vmul.f32 %v508, %v505
    %v510 = vmul.f32 %v508, %v506
    %v511 = vadd.f32 %v449, %v509
    %v512 = vadd.f32 %v450, %v510
    %s513 = sld [smem:[#allocation2 + $0xc]]
    %v514 = vstv %s513
    %v515 = vmul.f32 %v514, %v505
    %v516 = vmul.f32 %v514, %v506
    %v517 = vadd.f32 %v455, %v515
    %v518 = vadd.f32 %v456, %v516
    %s519 = sld [smem:[#allocation2 + $0x13]]
    %v520 = vstv %s519
    %v521 = vmul.f32 %v520, %v505
    %v522 = vmul.f32 %v520, %v506
    %v523 = vadd.f32 %v461, %v521
    %v524 = vadd.f32 %v462, %v522
    %s525 = sld [smem:[#allocation2 + $0x1a]]
    %v526 = vstv %s525
    %v527 = vmul.f32 %v526, %v505
    %v528 = vmul.f32 %v526, %v506
    %v529 = vadd.f32 %v467, %v527
    %v530 = vadd.f32 %v468, %v528
    %s531 = sld [smem:[#allocation2 + $0x21]]
    %v532 = vstv %s531
    %v533 = vmul.f32 %v532, %v505
    %v534 = vmul.f32 %v532, %v506
    %v535 = vadd.f32 %v473, %v533
    %v536 = vadd.f32 %v474, %v534
    %s537 = sld [smem:[#allocation2 + $0x28]]
    %v538 = vstv %s537
    %v539 = vmul.f32 %v538, %v505
    %v540 = vmul.f32 %v538, %v506
    %v541 = vadd.f32 %v479, %v539
    %v542 = vadd.f32 %v480, %v540
    %s543 = sld [smem:[#allocation2 + $0x2f]]
    %v544 = vstv %s543
    %v545 = vmul.f32 %v544, %v505
    %v546 = vmul.f32 %v544, %v506
    %v547 = vadd.f32 %v485, %v545
    %v548 = vadd.f32 %v486, %v546
    %549 = vrot.lane.b32.xlu0 %v135, 125
    %v550 = vpop.permute.xlu0 %549
    %551 = vrot.lane.b32.xlu0 %v136, 125
    %v552 = vpop.permute.xlu0 %551
    %vm553 = vcmp.lt.s32.totalorder %v144, 125
    %v554 = vsel %vm553, %v550, %v552
    %v555 = vsel %vm553, %v552, %v550
    %v556 = vsel %vm129, 1, 0
    %v557 = vlaneseq
    %v558 = vshrl.u32 %v557, 7
    %v559 = vsub.s32 0, %v558
    %v560 = vrot.slane %v556, %v559
    %v561 = vlaneseq
    %v562 = vshrl.u32 %v561, 7
    %v563 = vsub.s32 1, %v562
    %v564 = vrot.slane %v556, %v563
    %vm565 = vcmp.eq.s32.totalorder %v560, 1
    %vm566 = vcmp.eq.s32.totalorder %v564, 1
    %v567 = vsel %vm565, %v554, 0.0
    %v568 = vsel %vm566, %v555, 0.0
    %s569 = sld [smem:[#allocation2 + $0x6]]
    %v570 = vstv %s569
    %v571 = vmul.f32 %v570, %v567
    %v572 = vmul.f32 %v570, %v568
    %v573 = vadd.f32 %v511, %v571
    %v574 = vadd.f32 %v512, %v572
    %s575 = sld [smem:[#allocation2 + $0xd]]
    %v576 = vstv %s575
    %v577 = vmul.f32 %v576, %v567
    %v578 = vmul.f32 %v576, %v568
    %v579 = vadd.f32 %v517, %v577
    %v580 = vadd.f32 %v518, %v578
    %s581 = sld [smem:[#allocation2 + $0x14]]
    %v582 = vstv %s581
    %v583 = vmul.f32 %v582, %v567
    %v584 = vmul.f32 %v582, %v568
    %v585 = vadd.f32 %v523, %v583
    %v586 = vadd.f32 %v524, %v584
    %s587 = sld [smem:[#allocation2 + $0x1b]]
    %v588 = vstv %s587
    %v589 = vmul.f32 %v588, %v567
    %v590 = vmul.f32 %v588, %v568
    %v591 = vadd.f32 %v529, %v589
    %v592 = vadd.f32 %v530, %v590
    %s593 = sld [smem:[#allocation2 + $0x22]]
    %v594 = vstv %s593
    %v595 = vmul.f32 %v594, %v567
    %v596 = vmul.f32 %v594, %v568
    %v597 = vadd.f32 %v535, %v595
    %v598 = vadd.f32 %v536, %v596
    %s599 = sld [smem:[#allocation2 + $0x29]]
    %v600 = vstv %s599
    %v601 = vmul.f32 %v600, %v567
    %v602 = vmul.f32 %v600, %v568
    %v603 = vadd.f32 %v541, %v601
    %v604 = vadd.f32 %v542, %v602
    %s605 = sld [smem:[#allocation2 + $0x30]]
    %v606 = vstv %s605
    %v607 = vmul.f32 %v606, %v567
    %v608 = vmul.f32 %v606, %v568
    %v609 = vadd.f32 %v547, %v607
    %v610 = vadd.f32 %v548, %v608
    %v615 = vsel %vm134, %v109, %v95
    %v616 = vsel %vm134, %v116, %v102
    %619 = vrot.lane.b32.xlu0 %v615, 3
    %v620 = vpop.permute.xlu0 %619
    %621 = vrot.lane.b32.xlu0 %v616, 3
    %v622 = vpop.permute.xlu0 %621
    %v623 = vsel %vm145, %v620, %v622
    %v624 = vsel %vm145, %v622, %v620
    %v625 = vsel %vm157, %v624, 0.0
    %v626 = vsel %vm158, %v623, 0.0
    %s627 = sld [smem:[#allocation2 + $0x31]]
    %v628 = vstv %s627
    %v629 = vmul.f32 %v628, %v625
    %v630 = vmul.f32 %v628, %v626
    %v631 = vadd.f32 %v573, %v629
    %v632 = vadd.f32 %v574, %v630
    %s633 = sld [smem:[#allocation2 + $0x38]]
    %v634 = vstv %s633
    %v635 = vmul.f32 %v634, %v625
    %v636 = vmul.f32 %v634, %v626
    %v637 = vadd.f32 %v579, %v635
    %v638 = vadd.f32 %v580, %v636
    %s639 = sld [smem:[#allocation2 + $0x3f]]
    %v640 = vstv %s639
    %v641 = vmul.f32 %v640, %v625
    %v642 = vmul.f32 %v640, %v626
    %v643 = vadd.f32 %v585, %v641
    %v644 = vadd.f32 %v586, %v642
    %s645 = sld [smem:[#allocation2 + $0x46]]
    %v646 = vstv %s645
    %v647 = vmul.f32 %v646, %v625
    %v648 = vmul.f32 %v646, %v626
    %v649 = vadd.f32 %v591, %v647
    %v650 = vadd.f32 %v592, %v648
    %s651 = sld [smem:[#allocation2 + $0x4d]]
    %v652 = vstv %s651
    %v653 = vmul.f32 %v652, %v625
    %v654 = vmul.f32 %v652, %v626
    %v655 = vadd.f32 %v597, %v653
    %v656 = vadd.f32 %v598, %v654
    %s657 = sld [smem:[#allocation2 + $0x54]]
    %v658 = vstv %s657
    %v659 = vmul.f32 %v658, %v625
    %v660 = vmul.f32 %v658, %v626
    %v661 = vadd.f32 %v603, %v659
    %v662 = vadd.f32 %v604, %v660
    %s663 = sld [smem:[#allocation2 + $0x5b]]
    %v664 = vstv %s663
    %v665 = vmul.f32 %v664, %v625
    %v666 = vmul.f32 %v664, %v626
    %v667 = vadd.f32 %v609, %v665
    %v668 = vadd.f32 %v610, %v666
    %669 = vrot.lane.b32.xlu0 %v615, 2
    %v670 = vpop.permute.xlu0 %669
    %671 = vrot.lane.b32.xlu0 %v616, 2
    %v672 = vpop.permute.xlu0 %671
    %v673 = vsel %vm193, %v670, %v672
    %v674 = vsel %vm193, %v672, %v670
    %v675 = vsel %vm205, %v674, 0.0
    %v676 = vsel %vm206, %v673, 0.0
    %s677 = sld [smem:[#allocation2 + $0x32]]
    %v678 = vstv %s677
    %v679 = vmul.f32 %v678, %v675
    %v680 = vmul.f32 %v678, %v676
    %v681 = vadd.f32 %v631, %v679
    %v682 = vadd.f32 %v632, %v680
    %s683 = sld [smem:[#allocation2 + $0x39]]
    %v684 = vstv %s683
    %v685 = vmul.f32 %v684, %v675
    %v686 = vmul.f32 %v684, %v676
    %v687 = vadd.f32 %v637, %v685
    %v688 = vadd.f32 %v638, %v686
    %s689 = sld [smem:[#allocation2 + $0x40]]
    %v690 = vstv %s689
    %v691 = vmul.f32 %v690, %v675
    %v692 = vmul.f32 %v690, %v676
    %v693 = vadd.f32 %v643, %v691
    %v694 = vadd.f32 %v644, %v692
    %s695 = sld [smem:[#allocation2 + $0x47]]
    %v696 = vstv %s695
    %v697 = vmul.f32 %v696, %v675
    %v698 = vmul.f32 %v696, %v676
    %v699 = vadd.f32 %v649, %v697
    %v700 = vadd.f32 %v650, %v698
    %s701 = sld [smem:[#allocation2 + $0x4e]]
    %v702 = vstv %s701
    %v703 = vmul.f32 %v702, %v675
    %v704 = vmul.f32 %v702, %v676
    %v705 = vadd.f32 %v655, %v703
    %v706 = vadd.f32 %v656, %v704
    %s707 = sld [smem:[#allocation2 + $0x55]]
    %v708 = vstv %s707
    %v709 = vmul.f32 %v708, %v675
    %v710 = vmul.f32 %v708, %v676
    %v711 = vadd.f32 %v661, %v709
    %v712 = vadd.f32 %v662, %v710
    %s713 = sld [smem:[#allocation2 + $0x5c]]
    %v714 = vstv %s713
    %v715 = vmul.f32 %v714, %v675
    %v716 = vmul.f32 %v714, %v676
    %v717 = vadd.f32 %v667, %v715
    %v718 = vadd.f32 %v668, %v716
    %719 = vrot.lane.b32.xlu0 %v615, 1
    %v720 = vpop.permute.xlu0 %719
    %721 = vrot.lane.b32.xlu0 %v616, 1
    %v722 = vpop.permute.xlu0 %721
    %v723 = vsel %vm255, %v720, %v722
    %v724 = vsel %vm255, %v722, %v720
    %v725 = vsel %vm267, %v724, 0.0
    %v726 = vsel %vm268, %v723, 0.0
    %s727 = sld [smem:[#allocation2 + $0x33]]
    %v728 = vstv %s727
    %v729 = vmul.f32 %v728, %v725
    %v730 = vmul.f32 %v728, %v726
    %v731 = vadd.f32 %v681, %v729
    %v732 = vadd.f32 %v682, %v730
    %s733 = sld [smem:[#allocation2 + $0x3a]]
    %v734 = vstv %s733
    %v735 = vmul.f32 %v734, %v725
    %v736 = vmul.f32 %v734, %v726
    %v737 = vadd.f32 %v687, %v735
    %v738 = vadd.f32 %v688, %v736
    %s739 = sld [smem:[#allocation2 + $0x41]]
    %v740 = vstv %s739
    %v741 = vmul.f32 %v740, %v725
    %v742 = vmul.f32 %v740, %v726
    %v743 = vadd.f32 %v693, %v741
    %v744 = vadd.f32 %v694, %v742
    %s745 = sld [smem:[#allocation2 + $0x48]]
    %v746 = vstv %s745
    %v747 = vmul.f32 %v746, %v725
    %v748 = vmul.f32 %v746, %v726
    %v749 = vadd.f32 %v699, %v747
    %v750 = vadd.f32 %v700, %v748
    %s751 = sld [smem:[#allocation2 + $0x4f]]
    %v752 = vstv %s751
    %v753 = vmul.f32 %v752, %v725
    %v754 = vmul.f32 %v752, %v726
    %v755 = vadd.f32 %v705, %v753
    %v756 = vadd.f32 %v706, %v754
    %s757 = sld [smem:[#allocation2 + $0x56]]
    %v758 = vstv %s757
    %v759 = vmul.f32 %v758, %v725
    %v760 = vmul.f32 %v758, %v726
    %v761 = vadd.f32 %v711, %v759
    %v762 = vadd.f32 %v712, %v760
    %s763 = sld [smem:[#allocation2 + $0x5d]]
    %v764 = vstv %s763
    %v765 = vmul.f32 %v764, %v725
    %v766 = vmul.f32 %v764, %v726
    %v767 = vadd.f32 %v717, %v765
    %v768 = vadd.f32 %v718, %v766
    %s769 = sld [smem:[#allocation2 + $0x34]]
    %v770 = vstv %s769
    %v771 = vmul.f32 %v770, %v95
    %v772 = vmul.f32 %v770, %v102
    %v773 = vmul.f32 %v770, %v109
    %v774 = vmul.f32 %v770, %v116
    %v779 = vsel %vm134, %v773, %v771
    %v780 = vsel %vm134, %v774, %v772
    %v783 = vadd.f32 %v731, %v779
    %v784 = vadd.f32 %v732, %v780
    %s785 = sld [smem:[#allocation2 + $0x3b]]
    %v786 = vstv %s785
    %v787 = vmul.f32 %v786, %v95
    %v788 = vmul.f32 %v786, %v102
    %v789 = vmul.f32 %v786, %v109
    %v790 = vmul.f32 %v786, %v116
    %v795 = vsel %vm134, %v789, %v787
    %v796 = vsel %vm134, %v790, %v788
    %v799 = vadd.f32 %v737, %v795
    %v800 = vadd.f32 %v738, %v796
    %s801 = sld [smem:[#allocation2 + $0x42]]
    %v802 = vstv %s801
    %v803 = vmul.f32 %v802, %v95
    %v804 = vmul.f32 %v802, %v102
    %v805 = vmul.f32 %v802, %v109
    %v806 = vmul.f32 %v802, %v116
    %v811 = vsel %vm134, %v805, %v803
    %v812 = vsel %vm134, %v806, %v804
    %v815 = vadd.f32 %v743, %v811
    %v816 = vadd.f32 %v744, %v812
    %s817 = sld [smem:[#allocation2 + $0x49]]
    %v818 = vstv %s817
    %v819 = vmul.f32 %v818, %v95
    %v820 = vmul.f32 %v818, %v102
    %v821 = vmul.f32 %v818, %v109
    %v822 = vmul.f32 %v818, %v116
    %v827 = vsel %vm134, %v821, %v819
    %v828 = vsel %vm134, %v822, %v820
    %v831 = vadd.f32 %v749, %v827
    %v832 = vadd.f32 %v750, %v828
    %s833 = sld [smem:[#allocation2 + $0x50]]
    %v834 = vstv %s833
    %v835 = vmul.f32 %v834, %v95
    %v836 = vmul.f32 %v834, %v102
    %v837 = vmul.f32 %v834, %v109
    %v838 = vmul.f32 %v834, %v116
    %v843 = vsel %vm134, %v837, %v835
    %v844 = vsel %vm134, %v838, %v836
    %v847 = vadd.f32 %v755, %v843
    %v848 = vadd.f32 %v756, %v844
    %s849 = sld [smem:[#allocation2 + $0x57]]
    %v850 = vstv %s849
    %v851 = vmul.f32 %v850, %v95
    %v852 = vmul.f32 %v850, %v102
    %v853 = vmul.f32 %v850, %v109
    %v854 = vmul.f32 %v850, %v116
    %v859 = vsel %vm134, %v853, %v851
    %v860 = vsel %vm134, %v854, %v852
    %v863 = vadd.f32 %v761, %v859
    %v864 = vadd.f32 %v762, %v860
    %s865 = sld [smem:[#allocation2 + $0x5e]]
    %v866 = vstv %s865
    %v867 = vmul.f32 %v866, %v95
    %v868 = vmul.f32 %v866, %v102
    %v869 = vmul.f32 %v866, %v109
    %v870 = vmul.f32 %v866, %v116
    %v875 = vsel %vm134, %v869, %v867
    %v876 = vsel %vm134, %v870, %v868
    %v879 = vadd.f32 %v767, %v875
    %v880 = vadd.f32 %v768, %v876
    %881 = vrot.lane.b32.xlu0 %v615, 127
    %v882 = vpop.permute.xlu0 %881
    %883 = vrot.lane.b32.xlu0 %v616, 127
    %v884 = vpop.permute.xlu0 %883
    %v885 = vsel %vm429, %v882, %v884
    %v886 = vsel %vm429, %v884, %v882
    %v887 = vsel %vm441, %v885, 0.0
    %v888 = vsel %vm442, %v886, 0.0
    %s889 = sld [smem:[#allocation2 + $0x35]]
    %v890 = vstv %s889
    %v891 = vmul.f32 %v890, %v887
    %v892 = vmul.f32 %v890, %v888
    %v893 = vadd.f32 %v783, %v891
    %v894 = vadd.f32 %v784, %v892
    %s895 = sld [smem:[#allocation2 + $0x3c]]
    %v896 = vstv %s895
    %v897 = vmul.f32 %v896, %v887
    %v898 = vmul.f32 %v896, %v888
    %v899 = vadd.f32 %v799, %v897
    %v900 = vadd.f32 %v800, %v898
    %s901 = sld [smem:[#allocation2 + $0x43]]
    %v902 = vstv %s901
    %v903 = vmul.f32 %v902, %v887
    %v904 = vmul.f32 %v902, %v888
    %v905 = vadd.f32 %v815, %v903
    %v906 = vadd.f32 %v816, %v904
    %s907 = sld [smem:[#allocation2 + $0x4a]]
    %v908 = vstv %s907
    %v909 = vmul.f32 %v908, %v887
    %v910 = vmul.f32 %v908, %v888
    %v911 = vadd.f32 %v831, %v909
    %v912 = vadd.f32 %v832, %v910
    %s913 = sld [smem:[#allocation2 + $0x51]]
    %v914 = vstv %s913
    %v915 = vmul.f32 %v914, %v887
    %v916 = vmul.f32 %v914, %v888
    %v917 = vadd.f32 %v847, %v915
    %v918 = vadd.f32 %v848, %v916
    %s919 = sld [smem:[#allocation2 + $0x58]]
    %v920 = vstv %s919
    %v921 = vmul.f32 %v920, %v887
    %v922 = vmul.f32 %v920, %v888
    %v923 = vadd.f32 %v863, %v921
    %v924 = vadd.f32 %v864, %v922
    %s925 = sld [smem:[#allocation2 + $0x5f]]
    %v926 = vstv %s925
    %v927 = vmul.f32 %v926, %v887
    %v928 = vmul.f32 %v926, %v888
    %v929 = vadd.f32 %v879, %v927
    %v930 = vadd.f32 %v880, %v928
    %931 = vrot.lane.b32.xlu0 %v615, 126
    %v932 = vpop.permute.xlu0 %931
    %933 = vrot.lane.b32.xlu0 %v616, 126
    %v934 = vpop.permute.xlu0 %933
    %v935 = vsel %vm491, %v932, %v934
    %v936 = vsel %vm491, %v934, %v932
    %v937 = vsel %vm503, %v935, 0.0
    %v938 = vsel %vm504, %v936, 0.0
    %s939 = sld [smem:[#allocation2 + $0x36]]
    %v940 = vstv %s939
    %v941 = vmul.f32 %v940, %v937
    %v942 = vmul.f32 %v940, %v938
    %v943 = vadd.f32 %v893, %v941
    %v944 = vadd.f32 %v894, %v942
    %s945 = sld [smem:[#allocation2 + $0x3d]]
    %v946 = vstv %s945
    %v947 = vmul.f32 %v946, %v937
    %v948 = vmul.f32 %v946, %v938
    %v949 = vadd.f32 %v899, %v947
    %v950 = vadd.f32 %v900, %v948
    %s951 = sld [smem:[#allocation2 + $0x44]]
    %v952 = vstv %s951
    %v953 = vmul.f32 %v952, %v937
    %v954 = vmul.f32 %v952, %v938
    %v955 = vadd.f32 %v905, %v953
    %v956 = vadd.f32 %v906, %v954
    %s957 = sld [smem:[#allocation2 + $0x4b]]
    %v958 = vstv %s957
    %v959 = vmul.f32 %v958, %v937
    %v960 = vmul.f32 %v958, %v938
    %v961 = vadd.f32 %v911, %v959
    %v962 = vadd.f32 %v912, %v960
    %s963 = sld [smem:[#allocation2 + $0x52]]
    %v964 = vstv %s963
    %v965 = vmul.f32 %v964, %v937
    %v966 = vmul.f32 %v964, %v938
    %v967 = vadd.f32 %v917, %v965
    %v968 = vadd.f32 %v918, %v966
    %s969 = sld [smem:[#allocation2 + $0x59]]
    %v970 = vstv %s969
    %v971 = vmul.f32 %v970, %v937
    %v972 = vmul.f32 %v970, %v938
    %v973 = vadd.f32 %v923, %v971
    %v974 = vadd.f32 %v924, %v972
    %s975 = sld [smem:[#allocation2 + $0x60]]
    %v976 = vstv %s975
    %v977 = vmul.f32 %v976, %v937
    %v978 = vmul.f32 %v976, %v938
    %v979 = vadd.f32 %v929, %v977
    %v980 = vadd.f32 %v930, %v978
    %981 = vrot.lane.b32.xlu0 %v615, 125
    %v982 = vpop.permute.xlu0 %981
    %983 = vrot.lane.b32.xlu0 %v616, 125
    %v984 = vpop.permute.xlu0 %983
    %v985 = vsel %vm553, %v982, %v984
    %v986 = vsel %vm553, %v984, %v982
    %v987 = vsel %vm565, %v985, 0.0
    %v988 = vsel %vm566, %v986, 0.0
    %s989 = sld [smem:[#allocation2 + $0x37]]
    %v990 = vstv %s989
    %v991 = vmul.f32 %v990, %v987
    %v992 = vmul.f32 %v990, %v988
    %v993 = vadd.f32 %v943, %v991
    %v994 = vadd.f32 %v944, %v992
    %s995 = sld [smem:[#allocation2 + $0x3e]]
    %v996 = vstv %s995
    %v997 = vmul.f32 %v996, %v987
    %v998 = vmul.f32 %v996, %v988
    %v999 = vadd.f32 %v949, %v997
    %v1000 = vadd.f32 %v950, %v998
    %s1001 = sld [smem:[#allocation2 + $0x45]]
    %v1002 = vstv %s1001
    %v1003 = vmul.f32 %v1002, %v987
    %v1004 = vmul.f32 %v1002, %v988
    %v1005 = vadd.f32 %v955, %v1003
    %v1006 = vadd.f32 %v956, %v1004
    %s1007 = sld [smem:[#allocation2 + $0x4c]]
    %v1008 = vstv %s1007
    %v1009 = vmul.f32 %v1008, %v987
    %v1010 = vmul.f32 %v1008, %v988
    %v1011 = vadd.f32 %v961, %v1009
    %v1012 = vadd.f32 %v962, %v1010
    %s1013 = sld [smem:[#allocation2 + $0x53]]
    %v1014 = vstv %s1013
    %v1015 = vmul.f32 %v1014, %v987
    %v1016 = vmul.f32 %v1014, %v988
    %v1017 = vadd.f32 %v967, %v1015
    %v1018 = vadd.f32 %v968, %v1016
    %s1019 = sld [smem:[#allocation2 + $0x5a]]
    %v1020 = vstv %s1019
    %v1021 = vmul.f32 %v1020, %v987
    %v1022 = vmul.f32 %v1020, %v988
    %v1023 = vadd.f32 %v973, %v1021
    %v1024 = vadd.f32 %v974, %v1022
    %s1025 = sld [smem:[#allocation2 + $0x61]]
    %v1026 = vstv %s1025
    %v1027 = vmul.f32 %v1026, %v987
    %v1028 = vmul.f32 %v1026, %v988
    %v1029 = vadd.f32 %v979, %v1027
    %v1030 = vadd.f32 %v980, %v1028
    %1031 = vrot.lane.b32.xlu0 %v993, 48
    %v1032 = vpop.permute.xlu0 %1031
    %1033 = vrot.lane.b32.xlu0 %v994, 48
    %v1034 = vpop.permute.xlu0 %1033
    %vm1035 = vcmp.lt.s32.totalorder %v144, 48
    %v1036 = vsel %vm1035, %v1032, %v1034
    %v1037 = vsel %vm1035, %v1034, %v1032
    %vm1038 = vcmp.ge.s32.totalorder %v121, 3
    %v1039 = vsel %vm1038, 1, 0
    %v1040 = vlaneseq
    %v1041 = vshrl.u32 %v1040, 7
    %v1042 = vsub.s32 0, %v1041
    %v1043 = vrot.slane %v1039, %v1042
    %v1044 = vlaneseq
    %v1045 = vshrl.u32 %v1044, 7
    %v1046 = vsub.s32 1, %v1045
    %v1047 = vrot.slane %v1039, %v1046
    %vm1048 = vcmp.eq.s32.totalorder %v1043, 1
    %vm1049 = vcmp.eq.s32.totalorder %v1047, 1
    %v1050 = vsel %vm1048, %v1037, 0.0
    %v1051 = vsel %vm1049, %v1036, 0.0
    %1052 = vrot.lane.b32.xlu0 %v999, 32
    %v1053 = vpop.permute.xlu0 %1052
    %1054 = vrot.lane.b32.xlu0 %v1000, 32
    %v1055 = vpop.permute.xlu0 %1054
    %vm1056 = vcmp.lt.s32.totalorder %v144, 32
    %v1057 = vsel %vm1056, %v1053, %v1055
    %v1058 = vsel %vm1056, %v1055, %v1053
    %vm1059 = vcmp.ge.s32.totalorder %v121, 2
    %v1060 = vsel %vm1059, 1, 0
    %v1061 = vlaneseq
    %v1062 = vshrl.u32 %v1061, 7
    %v1063 = vsub.s32 0, %v1062
    %v1064 = vrot.slane %v1060, %v1063
    %v1065 = vlaneseq
    %v1066 = vshrl.u32 %v1065, 7
    %v1067 = vsub.s32 1, %v1066
    %v1068 = vrot.slane %v1060, %v1067
    %vm1069 = vcmp.eq.s32.totalorder %v1064, 1
    %vm1070 = vcmp.eq.s32.totalorder %v1068, 1
    %v1071 = vsel %vm1069, %v1058, 0.0
    %v1072 = vsel %vm1070, %v1057, 0.0
    %v1073 = vadd.f32 %v1050, %v1071
    %v1074 = vadd.f32 %v1051, %v1072
    %1075 = vrot.lane.b32.xlu0 %v1005, 16
    %v1076 = vpop.permute.xlu0 %1075
    %1077 = vrot.lane.b32.xlu0 %v1006, 16
    %v1078 = vpop.permute.xlu0 %1077
    %vm1079 = vcmp.lt.s32.totalorder %v144, 16
    %v1080 = vsel %vm1079, %v1076, %v1078
    %v1081 = vsel %vm1079, %v1078, %v1076
    %vm1082 = vcmp.ge.s32.totalorder %v121, 1
    %v1083 = vsel %vm1082, 1, 0
    %v1084 = vlaneseq
    %v1085 = vshrl.u32 %v1084, 7
    %v1086 = vsub.s32 0, %v1085
    %v1087 = vrot.slane %v1083, %v1086
    %v1088 = vlaneseq
    %v1089 = vshrl.u32 %v1088, 7
    %v1090 = vsub.s32 1, %v1089
    %v1091 = vrot.slane %v1083, %v1090
    %vm1092 = vcmp.eq.s32.totalorder %v1087, 1
    %vm1093 = vcmp.eq.s32.totalorder %v1091, 1
    %v1094 = vsel %vm1092, %v1081, 0.0
    %v1095 = vsel %vm1093, %v1080, 0.0
    %v1096 = vadd.f32 %v1073, %v1094
    %v1097 = vadd.f32 %v1074, %v1095
    %v1098 = vadd.f32 %v1096, %v1011
    %v1099 = vadd.f32 %v1097, %v1012
    %1100 = vrot.lane.b32.xlu0 %v1017, 112
    %v1101 = vpop.permute.xlu0 %1100
    %1102 = vrot.lane.b32.xlu0 %v1018, 112
    %v1103 = vpop.permute.xlu0 %1102
    %vm1104 = vcmp.lt.s32.totalorder %v144, 112
    %v1105 = vsel %vm1104, %v1101, %v1103
    %v1106 = vsel %vm1104, %v1103, %v1101
    %vm1107 = vcmp.lt.s32.totalorder %v121, 15
    %v1108 = vsel %vm1107, 1, 0
    %v1109 = vlaneseq
    %v1110 = vshrl.u32 %v1109, 7
    %v1111 = vsub.s32 0, %v1110
    %v1112 = vrot.slane %v1108, %v1111
    %v1113 = vlaneseq
    %v1114 = vshrl.u32 %v1113, 7
    %v1115 = vsub.s32 1, %v1114
    %v1116 = vrot.slane %v1108, %v1115
    %vm1117 = vcmp.eq.s32.totalorder %v1112, 1
    %vm1118 = vcmp.eq.s32.totalorder %v1116, 1
    %v1119 = vsel %vm1117, %v1105, 0.0
    %v1120 = vsel %vm1118, %v1106, 0.0
    %v1121 = vadd.f32 %v1098, %v1119
    %v1122 = vadd.f32 %v1099, %v1120
    %1123 = vrot.lane.b32.xlu0 %v1023, 96
    %v1124 = vpop.permute.xlu0 %1123
    %1125 = vrot.lane.b32.xlu0 %v1024, 96
    %v1126 = vpop.permute.xlu0 %1125
    %vm1127 = vcmp.lt.s32.totalorder %v144, 96
    %v1128 = vsel %vm1127, %v1124, %v1126
    %v1129 = vsel %vm1127, %v1126, %v1124
    %vm1130 = vcmp.lt.s32.totalorder %v121, 14
    %v1131 = vsel %vm1130, 1, 0
    %v1132 = vlaneseq
    %v1133 = vshrl.u32 %v1132, 7
    %v1134 = vsub.s32 0, %v1133
    %v1135 = vrot.slane %v1131, %v1134
    %v1136 = vlaneseq
    %v1137 = vshrl.u32 %v1136, 7
    %v1138 = vsub.s32 1, %v1137
    %v1139 = vrot.slane %v1131, %v1138
    %vm1140 = vcmp.eq.s32.totalorder %v1135, 1
    %vm1141 = vcmp.eq.s32.totalorder %v1139, 1
    %v1142 = vsel %vm1140, %v1128, 0.0
    %v1143 = vsel %vm1141, %v1129, 0.0
    %v1144 = vadd.f32 %v1121, %v1142
    %v1145 = vadd.f32 %v1122, %v1143
    %1146 = vrot.lane.b32.xlu0 %v1029, 80
    %v1147 = vpop.permute.xlu0 %1146
    %1148 = vrot.lane.b32.xlu0 %v1030, 80
    %v1149 = vpop.permute.xlu0 %1148
    %vm1150 = vcmp.lt.s32.totalorder %v144, 80
    %v1151 = vsel %vm1150, %v1147, %v1149
    %v1152 = vsel %vm1150, %v1149, %v1147
    %vm1153 = vcmp.lt.s32.totalorder %v121, 13
    %v1154 = vsel %vm1153, 1, 0
    %v1155 = vlaneseq
    %v1156 = vshrl.u32 %v1155, 7
    %v1157 = vsub.s32 0, %v1156
    %v1158 = vrot.slane %v1154, %v1157
    %v1159 = vlaneseq
    %v1160 = vshrl.u32 %v1159, 7
    %v1161 = vsub.s32 1, %v1160
    %v1162 = vrot.slane %v1154, %v1161
    %vm1163 = vcmp.eq.s32.totalorder %v1158, 1
    %vm1164 = vcmp.eq.s32.totalorder %v1162, 1
    %v1165 = vsel %vm1163, %v1151, 0.0
    %v1166 = vsel %vm1164, %v1152, 0.0
    %v1167 = vadd.f32 %v1144, %v1165
    %v1168 = vadd.f32 %v1145, %v1166
    %v1169 = vxor.u32 %v1167, 2147483648
    %v1170 = vxor.u32 %v1168, 2147483648
    %v1171 = vmul.f32 %v1169, 1.442695
    %v1172 = vpow.pop %v1171
    %v1173 = vmul.f32 %v1170, 1.442695
    %v1174 = vpow.pop %v1173
    %v1175 = vadd.f32 %v1172, 1.0
    %v1176 = vadd.f32 %v1174, 1.0
    %v1177 = vrcp.pop %v1175
    %v1178 = vmul.f32 1.0, %v1177
    %v1179 = vrcp.pop %v1176
    %v1180 = vmul.f32 1.0, %v1179
    %v1183 = vcombine.low %v1178, %v1180
    %v1185 = vunpack.c.l.s4 1983009808
    %v1186 = vunpack.c.0.s8 %v1185
    %v1187 = vlaneseq
    %v1188 = vshrl.u32 %v1187, 7
    %v1189 = vsub.s32 %v1186, %v1188
    %v1190 = vrot.slane %v1183, %v1189
    %1192 = vst [vmem:[#allocation9] sm:$0xf] %v1190
    // Predicated region
    $region26: #{tpu_custom_call.1} parent=1 // pred_check
      _
    $region27: #{tpu_custom_call.1} parent=1 // pred_check_branch
      %1194 = sbr.rel (0) target = $region29
    $region28: #{tpu_custom_call.1} parent=1 // pred_region
      %s1196 = ssub.s32 64, 64
      %1197 = vsyncadd [#allocation4], %s1196
      %s1199 = sshll.u32 [#allocation9], 4
      %s1200 = int_to_ptr.vmem [resolvable:$true] %s1199
      %1202 = dma.vmem_to_hbm [thread:$0]  %s1200, 64, %s3, [#allocation4]
    $region29: #{tpu_custom_call.1} parent=1 // pred_fallthru
      _
    // Predicated region
    $region30: #{tpu_custom_call.1} parent=1 // pred_check
      _
    $region31: #{tpu_custom_call.1} parent=1 // pred_check_branch
      %1204 = sbr.rel (0) target = $region33
    $region32: #{tpu_custom_call.1} parent=1 // pred_region
      %1205 = dma.done [#allocation4], 64
    $region33: #{tpu_custom_call.1} parent=1 // pred_fallthru
      _
    %1206 = vsyncpa [#allocation3], 1
    %1207 = vsyncpa [#allocation8], 1
    %1208 = vsyncpa [#allocation4], 1
    %1209 = vsyncpa [#allocation5], 1

</llo_original>
